<compile_context>
chip_gen: v5e
topology: v5e:2x2
jax: 0.10.0
libtpu: 0.0.40
codegen_flags: <defaults>
</compile_context>

<pallas_src>
import functools

import jax
import jax.numpy as jnp
import numpy as np
from jax.experimental import pallas as pl
from jax.experimental.pallas import tpu as pltpu


# ---------------------------------------------------------------------------
# Fused BasicBlock kernel (B_blk images per grid step, everything in VMEM)
# ---------------------------------------------------------------------------
def _basic_block_kernel(*refs, stride, hp, ho, wo, bblk, planes, proj):
    if proj:
        (x_ref, w1_ref, b1_ref, w2_ref, b2_ref,
         wsc_ref, bsc_ref, o_ref, out1p_ref) = refs
    else:
        x_ref, w1_ref, b1_ref, w2_ref, b2_ref, o_ref, out1p_ref = refs

    f32 = jnp.float32
    cdt = out1p_ref.dtype                  # MXU operand dtype (f32 or bf16)
    cin = x_ref.shape[-1]
    m = bblk * ho * wo

    # ---- conv1 (3x3, stride) with bn1 folded into the weights, then ReLU.
    #      im2col built in VMEM: the 9 tap windows of the phase-decomposed
    #      padded input are concatenated on the channel axis -> ONE dot, K=9*cin.
    taps = []
    for kh in range(3):
        for kw in range(3):
            phase = (kh % stride) * stride + (kw % stride)
            dh, dw = kh // stride, kw // stride
            r0 = phase * hp + dh
            taps.append(x_ref[:, r0:r0 + ho, dw:dw + wo, :])   # (bblk,ho,wo,cin)
    lhs1 = jnp.concatenate(taps, axis=-1).reshape(m, 9 * cin)
    out1 = jnp.maximum(
        jnp.dot(lhs1, w1_ref[...], preferred_element_type=f32) + b1_ref[...],
        0.0)                                                   # (m, planes) f32

    # ---- shortcut: identity, or 1x1 stride-s conv with its BN folded.
    a = 1 % stride
    r0 = (a * stride + a) * hp + (1 - a) // stride
    c0 = (1 - a) // stride
    sc_win = x_ref[:, r0:r0 + ho, c0:c0 + wo, :].reshape(m, cin)
    if proj:
        acc = (jnp.dot(sc_win, wsc_ref[...], preferred_element_type=f32)
               + bsc_ref[...])
    else:
        acc = sc_win[:, :planes].astype(f32)

    # ---- conv2 (3x3, stride 1) with bn2 folded.  The conv1 output only ever
    #      lives in the VMEM halo scratch.  Zero just the 1-wide halo (the
    #      interior is fully overwritten every step, so never re-zeroed).
    zrow = jnp.zeros((bblk, 1, wo + 2, planes), cdt)
    zcol = jnp.zeros((bblk, ho + 2, 1, planes), cdt)
    out1p_ref[:, 0:1, :, :] = zrow
    out1p_ref[:, ho + 1:ho + 2, :, :] = zrow
    out1p_ref[:, :, 0:1, :] = zcol
    out1p_ref[:, :, wo + 1:wo + 2, :] = zcol
    out1p_ref[:, 1:1 + ho, 1:1 + wo, :] = (
        out1.astype(cdt).reshape(bblk, ho, wo, planes))

    taps2 = [out1p_ref[:, kh:kh + ho, kw:kw + wo, :]
             for kh in range(3) for kw in range(3)]
    lhs2 = jnp.concatenate(taps2, axis=-1).reshape(m, 9 * planes)
    acc = acc + jnp.dot(lhs2, w2_ref[...],
                        preferred_element_type=f32) + b2_ref[...]
    res = jnp.maximum(acc, 0.0)                                # (m, planes) f32

    # ---- lane-dense store: emit each image as (planes, ho*wo).
    o_ref[...] = jnp.transpose(res.reshape(bblk, ho * wo, planes),
                               (0, 2, 1)).astype(o_ref.dtype)


# ---------------------------------------------------------------------------
# Trace-time glue: BN folding, phase decomposition, batch-block sizing
# ---------------------------------------------------------------------------
def _fold_conv_bn(w_oihw, bn):
    """(Cout,Cin,kh,kw) conv weight + inference BN -> per-tap scaled weight
    (kh*kw, Cin, Cout) and f32 bias (1, Cout)."""
    scale = bn["gamma"] / jnp.sqrt(bn["var"] + bn["eps"])
    bias = bn["beta"] - bn["mean"] * scale
    cout, cin, kh, kw = w_oihw.shape
    w = jnp.transpose(w_oihw, (2, 3, 1, 0)).reshape(kh * kw, cin, cout)
    return ((w * scale[None, None, :]).astype(jnp.float32),
            bias.reshape(1, cout).astype(jnp.float32))


def _build_phases(x_nhwc, stride, hp, wp):
    """Phase-decomposed zero-padded input, shape (N, s*s*hp, wp, C).
    Tap (kh,kw) of a stride-s 3x3 conv is then the unit-stride (Ho,Wo) window
    of phase (kh%s, kw%s) at offset (kh//s, kw//s) -- ~1x HBM traffic."""
    n, _, _, c = x_nhwc.shape
    xp = jnp.pad(x_nhwc, ((0, 0), (1, 1), (1, 1), (0, 0)))
    phase_list = []
    for a in range(stride):
        for b in range(stride):
            p = xp[:, a::stride, b::stride, :][:, :hp, :wp, :]
            pad_h, pad_w = hp - p.shape[1], wp - p.shape[2]
            if pad_h or pad_w:
                p = jnp.pad(p, ((0, 0), (0, pad_h), (0, pad_w), (0, 0)))
            phase_list.append(p)
    xph = jnp.stack(phase_list, axis=1)            # (N, s*s, hp, wp, C)
    return xph.reshape(n, stride * stride * hp, wp, c)


def _pick_batch_block(n, per_img_vmem_bytes, rows_per_img,
                      m_cap=2048, vmem_budget=24 * 1024 * 1024):
    """Largest divisor of n that keeps the matmul M dim <= m_cap and the
    per-step VMEM footprint within budget; prefer >= 2 grid steps so v7x's
    two TensorCores both get work (v5e/v6e are single-TC, so no cost there)."""
    feasible = [d for d in range(1, n + 1)
                if n % d == 0
                and d * rows_per_img <= m_cap
                and d * per_img_vmem_bytes <= vmem_budget]
    if not feasible:
        return 1
    multi_step = [d for d in feasible if n // d >= 2]
    return max(multi_step) if multi_step else max(feasible)


# ---------------------------------------------------------------------------
# BasicBlock forward (Pallas path).  x is NCHW, output is NCHW (like PyTorch).
# ---------------------------------------------------------------------------
def basic_block_forward(x_nchw, params, stride, compute_dtype=jnp.float32):
    n, cin, h, w = x_nchw.shape
    planes = params["w1"].shape[0]
    proj = "w_sc" in params
    if not proj:
        # Identity shortcut is only valid when channel counts match.
        assert cin == planes, "identity shortcut needs in_planes == planes"

    ho = (h + 2 - 3) // stride + 1
    wo = (w + 2 - 3) // stride + 1
    # Rows/cols needed per phase: ho + (2 // stride), NOT (ho + 2) // stride.
    hp = ho + (2 // stride)
    wp = wo + (2 // stride)
    s2 = stride * stride

    # Fold BN scale into the conv weights; only the f32 biases enter the kernel.
    w1, b1 = _fold_conv_bn(params["w1"], params["bn1"])      # (9,cin,P), (1,P)
    w2, b2 = _fold_conv_bn(params["w2"], params["bn2"])      # (9,P,P),  (1,P)
    if proj:
        wsc, bsc = _fold_conv_bn(params["w_sc"], params["bn_sc"])
        wsc = wsc[0]                                         # (cin, P)

    # Pad input channels to a sublane multiple so every matmul K-dim is >= 8.
    cpad = (-cin) % 8
    cin_p = cin + cpad
    x = jnp.transpose(x_nchw, (0, 2, 3, 1))                  # NCHW -> NHWC
    if cpad:
        x = jnp.pad(x, ((0, 0), (0, 0), (0, 0), (0, cpad)))
        w1 = jnp.pad(w1, ((0, 0), (0, cpad), (0, 0)))
        if proj:
            wsc = jnp.pad(wsc, ((0, cpad), (0, 0)))

    # Tap-fused weight matrices (contraction K = 9*C), MXU-operand dtype.
    w1m = w1.reshape(9 * cin_p, planes).astype(compute_dtype)
    w2m = w2.reshape(9 * planes, planes).astype(compute_dtype)

    xph = _build_phases(x.astype(compute_dtype), stride, hp, wp)

    # Batch-block sizing under an explicit VMEM budget (v7x: 64 MiB physical /
    # 32 MiB scoped, so keep 2x(in+out) blocks + scratch + temporaries small).
    itemsize = jnp.dtype(compute_dtype).itemsize
    per_img = (2 * s2 * hp * wp * cin_p * itemsize           # in block (x2 buf)
               + 2 * planes * ho * wo * 4                    # out block (x2 buf)
               + (ho + 2) * (wo + 2) * planes * itemsize     # conv1 halo scratch
               + ho * wo * 9 * (cin_p + planes) * itemsize   # im2col temporaries
               + 4 * ho * wo * planes * 4)                   # f32 accum/epilogue
    bblk = _pick_batch_block(n, per_img, ho * wo)
    grid = (n // bblk,)

    operands = [xph, w1m, b1, w2m, b2]
    in_specs = [
        pl.BlockSpec((bblk, s2 * hp, wp, cin_p), lambda i: (i, 0, 0, 0)),
        pl.BlockSpec((9 * cin_p, planes), lambda i: (0, 0)),
        pl.BlockSpec((1, planes), lambda i: (0, 0)),
        pl.BlockSpec((9 * planes, planes), lambda i: (0, 0)),
        pl.BlockSpec((1, planes), lambda i: (0, 0)),
    ]
    if proj:
        operands += [wsc.astype(compute_dtype), bsc]
        in_specs += [pl.BlockSpec((cin_p, planes), lambda i: (0, 0)),
                     pl.BlockSpec((1, planes), lambda i: (0, 0))]

    kernel = functools.partial(_basic_block_kernel, stride=stride, hp=hp,
                               ho=ho, wo=wo, bblk=bblk, planes=planes,
                               proj=proj)
    out = pl.pallas_call(
        kernel,
        out_shape=jax.ShapeDtypeStruct((n, planes, ho * wo), jnp.float32),
        grid=grid,
        in_specs=in_specs,
        out_specs=pl.BlockSpec((bblk, planes, ho * wo), lambda i: (i, 0, 0)),
        scratch_shapes=[
            pltpu.VMEM((bblk, ho + 2, wo + 2, planes), compute_dtype)],
        compiler_params=pltpu.CompilerParams(
            dimension_semantics=("parallel",),
            vmem_limit_bytes=32 * 1024 * 1024),
    )(*operands)
    return out.reshape(n, planes, ho, wo)


basic_block = jax.jit(basic_block_forward,
                      static_argnames=("stride", "compute_dtype"))


# ---------------------------------------------------------------------------
# Parameter init (matches the PyTorch module's structure)
# ---------------------------------------------------------------------------
def init_bn(key, c):
    kg, kb = jax.random.split(key)
    return dict(
        gamma=jax.random.uniform(kg, (c,), jnp.float32, 0.5, 1.5),
        beta=0.1 * jax.random.normal(kb, (c,), jnp.float32),
        mean=jnp.zeros((c,), jnp.float32),
        var=jnp.ones((c,), jnp.float32),
        eps=1e-5,
    )


def init_params(key, in_planes, planes, stride):
    ks = jax.random.split(key, 6)
    params = dict(
        w1=0.1 * jax.random.normal(ks[0], (planes, in_planes, 3, 3), jnp.float32),
        bn1=init_bn(ks[1], planes),
        w2=0.1 * jax.random.normal(ks[2], (planes, planes, 3, 3), jnp.float32),
        bn2=init_bn(ks[3], planes),
    )
    if stride != 1 or in_planes != planes:
        params["w_sc"] = 0.1 * jax.random.normal(
            ks[4], (planes, in_planes, 1, 1), jnp.float32)
        params["bn_sc"] = init_bn(ks[5], planes)
    return params


# ---------------------------------------------------------------------------
# Pure-JAX reference (correctness check only), NCHW like the PyTorch module.
# ---------------------------------------------------------------------------
def _bn_scale_bias(bn):
    scale = bn["gamma"] / jnp.sqrt(bn["var"] + bn["eps"])
    return scale, bn["beta"] - bn["mean"] * scale


def _conv_ref(x, w_oihw, stride, pad):
    return jax.lax.conv_general_dilated(
        x, w_oihw, window_strides=(stride, stride),
        padding=((pad, pad), (pad, pad)),
        dimension_numbers=("NCHW", "OIHW", "NCHW"))


def basic_block_ref(x_nchw, params, stride):
    cin = x_nchw.shape[1]
    planes = params["w1"].shape[0]
    s1, b1 = _bn_scale_bias(params["bn1"])
    out = jnp.maximum(_conv_ref(x_nchw, params["w1"], stride, 1)
                      * s1[None, :, None, None] + b1[None, :, None, None], 0.0)
    s2, b2 = _bn_scale_bias(params["bn2"])
    out = (_conv_ref(out, params["w2"], 1, 1)
           * s2[None, :, None, None] + b2[None, :, None, None])
    if stride != 1 or cin != planes:
        ss, bs = _bn_scale_bias(params["bn_sc"])
        sc = (_conv_ref(x_nchw, params["w_sc"], stride, 0)
              * ss[None, :, None, None] + bs[None, :, None, None])
    else:
        sc = x_nchw
    return jnp.maximum(out + sc, 0.0)


# ---------------------------------------------------------------------------
if __name__ == "__main__":
    key = jax.random.PRNGKey(0)
    k1, k2, k3, k4 = jax.random.split(key, 4)

    # Case 1: projection shortcut (stride=2, channels 4 -> 8), f32 operands.
    x1 = jax.random.normal(k1, (2, 4, 16, 16), jnp.float32)      # NCHW
    p1 = init_params(k2, in_planes=4, planes=8, stride=2)
    out1 = jax.block_until_ready(basic_block(x1, p1, stride=2))
    ref1 = basic_block_ref(x1, p1, 2)
    np.testing.assert_allclose(np.asarray(out1), np.asarray(ref1),
                               rtol=1e-4, atol=1e-4)

    # Case 2: identity shortcut (stride=1, in_planes == planes == 8), f32.
    x2 = jax.random.normal(k3, (2, 8, 16, 16), jnp.float32)
    p2 = init_params(k4, in_planes=8, planes=8, stride=1)
    out2 = jax.block_until_ready(basic_block(x2, p2, stride=1))
    ref2 = basic_block_ref(x2, p2, 1)
    np.testing.assert_allclose(np.asarray(out2), np.asarray(ref2),
                               rtol=1e-4, atol=1e-4)

    # Case 3: bf16 MXU-operand path (v6e/v7x feedback); accumulation stays f32.
    out3 = jax.block_until_ready(
        basic_block(x1, p1, stride=2, compute_dtype=jnp.bfloat16))
    np.testing.assert_allclose(np.asarray(out3), np.asarray(ref1),
                               rtol=1e-1, atol=1e-1)

    print("KERNEL_OK")
</pallas_src>

<mosaic_0001>
module attributes {stable_mosaic.version = 11 : i64} {
  func.func @_basic_block_kernel(%arg0: i32, %arg1: memref<1x36x9x8xf32, #tpu.memory_space<vmem>>, %arg2: memref<72x8xf32, #tpu.memory_space<vmem>>, %arg3: memref<1x8xf32, #tpu.memory_space<vmem>>, %arg4: memref<72x8xf32, #tpu.memory_space<vmem>>, %arg5: memref<1x8xf32, #tpu.memory_space<vmem>>, %arg6: memref<8x8xf32, #tpu.memory_space<vmem>>, %arg7: memref<1x8xf32, #tpu.memory_space<vmem>>, %arg8: memref<1x8x64xf32, #tpu.memory_space<vmem>>, %arg9: memref<1x10x10x8xf32, #tpu.memory_space<vmem>>) attributes {dimension_semantics = [#tpu.dimension_semantics<parallel>], iteration_bounds = array<i64: 2>, scalar_prefetch = 0 : i64, scratch_operands = 1 : i64, tpu.core_type = #tpu.core_type<tc>, window_params = [{transform_indices = @transform_0, window_bounds = array<i64: 1, 36, 9, 8>}, {pipeline_mode = #tpu.pipeline_mode<synchronous>, transform_indices = @transform_1, window_bounds = array<i64: 72, 8>}, {pipeline_mode = #tpu.pipeline_mode<synchronous>, transform_indices = @transform_2, window_bounds = array<i64: 1, 8>}, {pipeline_mode = #tpu.pipeline_mode<synchronous>, transform_indices = @transform_3, window_bounds = array<i64: 72, 8>}, {pipeline_mode = #tpu.pipeline_mode<synchronous>, transform_indices = @transform_4, window_bounds = array<i64: 1, 8>}, {pipeline_mode = #tpu.pipeline_mode<synchronous>, transform_indices = @transform_5, window_bounds = array<i64: 8, 8>}, {pipeline_mode = #tpu.pipeline_mode<synchronous>, transform_indices = @transform_6, window_bounds = array<i64: 1, 8>}, {transform_indices = @transform_7, window_bounds = array<i64: 1, 8, 64>}]} {
    %c0 = arith.constant 0 : index
    %c0_0 = arith.constant 0 : index
    %c0_1 = arith.constant 0 : index
    %c0_2 = arith.constant 0 : index
    %0 = vector.load %arg1[%c0, %c0_0, %c0_1, %c0_2] : memref<1x36x9x8xf32, #tpu.memory_space<vmem>>, vector<1x8x8x8xf32>
    %c0_3 = arith.constant 0 : index
    %c9 = arith.constant 9 : index
    %c0_4 = arith.constant 0 : index
    %c0_5 = arith.constant 0 : index
    %1 = vector.load %arg1[%c0_3, %c9, %c0_4, %c0_5] : memref<1x36x9x8xf32, #tpu.memory_space<vmem>>, vector<1x8x8x8xf32>
    %c0_6 = arith.constant 0 : index
    %c0_7 = arith.constant 0 : index
    %c1 = arith.constant 1 : index
    %c0_8 = arith.constant 0 : index
    %2 = vector.load %arg1[%c0_6, %c0_7, %c1, %c0_8] : memref<1x36x9x8xf32, #tpu.memory_space<vmem>>, vector<1x8x8x8xf32>
    %c0_9 = arith.constant 0 : index
    %c18 = arith.constant 18 : index
    %c0_10 = arith.constant 0 : index
    %c0_11 = arith.constant 0 : index
    %3 = vector.load %arg1[%c0_9, %c18, %c0_10, %c0_11] : memref<1x36x9x8xf32, #tpu.memory_space<vmem>>, vector<1x8x8x8xf32>
    %c0_12 = arith.constant 0 : index
    %c27 = arith.constant 27 : index
    %c0_13 = arith.constant 0 : index
    %c0_14 = arith.constant 0 : index
    %4 = vector.load %arg1[%c0_12, %c27, %c0_13, %c0_14] : memref<1x36x9x8xf32, #tpu.memory_space<vmem>>, vector<1x8x8x8xf32>
    %c0_15 = arith.constant 0 : index
    %c18_16 = arith.constant 18 : index
    %c1_17 = arith.constant 1 : index
    %c0_18 = arith.constant 0 : index
    %5 = vector.load %arg1[%c0_15, %c18_16, %c1_17, %c0_18] : memref<1x36x9x8xf32, #tpu.memory_space<vmem>>, vector<1x8x8x8xf32>
    %c0_19 = arith.constant 0 : index
    %c1_20 = arith.constant 1 : index
    %c0_21 = arith.constant 0 : index
    %c0_22 = arith.constant 0 : index
    %6 = vector.load %arg1[%c0_19, %c1_20, %c0_21, %c0_22] : memref<1x36x9x8xf32, #tpu.memory_space<vmem>>, vector<1x8x8x8xf32>
    %c0_23 = arith.constant 0 : index
    %c10 = arith.constant 10 : index
    %c0_24 = arith.constant 0 : index
    %c0_25 = arith.constant 0 : index
    %7 = vector.load %arg1[%c0_23, %c10, %c0_24, %c0_25] : memref<1x36x9x8xf32, #tpu.memory_space<vmem>>, vector<1x8x8x8xf32>
    %c0_26 = arith.constant 0 : index
    %c1_27 = arith.constant 1 : index
    %c1_28 = arith.constant 1 : index
    %c0_29 = arith.constant 0 : index
    %8 = vector.load %arg1[%c0_26, %c1_27, %c1_28, %c0_29] : memref<1x36x9x8xf32, #tpu.memory_space<vmem>>, vector<1x8x8x8xf32>
    %9 = tpu.concatenate %0, %1, %2, %3, %4, %5, %6, %7, %8 in 3 : vector<1x8x8x8xf32>, vector<1x8x8x8xf32>, vector<1x8x8x8xf32>, vector<1x8x8x8xf32>, vector<1x8x8x8xf32>, vector<1x8x8x8xf32>, vector<1x8x8x8xf32>, vector<1x8x8x8xf32>, vector<1x8x8x8xf32> -> vector<1x8x8x72xf32>
    %10 = vector.shape_cast %9 : vector<1x8x8x72xf32> to vector<64x72xf32>
    %c0_30 = arith.constant 0 : index
    %c0_31 = arith.constant 0 : index
    %11 = vector.load %arg2[%c0_30, %c0_31] : memref<72x8xf32, #tpu.memory_space<vmem>>, vector<72x8xf32>
    %cst = arith.constant dense<0.000000e+00> : vector<64x8xf32>
    %12 = tpu.matmul %10, %11, %cst {dimension_numbers = #tpu.dot_dimension_numbers<[1], [0], [0], [1], [0, 0, 1, 1], [], []>} : vector<64x72xf32>, vector<72x8xf32>, vector<64x8xf32> -> vector<64x8xf32>
    %c0_32 = arith.constant 0 : index
    %c0_33 = arith.constant 0 : index
    %13 = vector.load %arg3[%c0_32, %c0_33] : memref<1x8xf32, #tpu.memory_space<vmem>>, vector<1x8xf32>
    %14 = vector.broadcast %13 : vector<1x8xf32> to vector<64x8xf32>
    %15 = arith.addf %12, %14 : vector<64x8xf32>
    %cst_34 = arith.constant 0.000000e+00 : f32
    %16 = vector.broadcast %cst_34 : f32 to vector<64x8xf32>
    %17 = arith.maximumf %15, %16 : vector<64x8xf32>
    %c0_35 = arith.constant 0 : index
    %c27_36 = arith.constant 27 : index
    %c0_37 = arith.constant 0 : index
    %c0_38 = arith.constant 0 : index
    %18 = vector.load %arg1[%c0_35, %c27_36, %c0_37, %c0_38] : memref<1x36x9x8xf32, #tpu.memory_space<vmem>>, vector<1x8x8x8xf32>
    %19 = vector.shape_cast %18 : vector<1x8x8x8xf32> to vector<64x8xf32>
    %c0_39 = arith.constant 0 : index
    %c0_40 = arith.constant 0 : index
    %20 = vector.load %arg6[%c0_39, %c0_40] : memref<8x8xf32, #tpu.memory_space<vmem>>, vector<8x8xf32>
    %cst_41 = arith.constant dense<0.000000e+00> : vector<64x8xf32>
    %21 = tpu.matmul %19, %20, %cst_41 {dimension_numbers = #tpu.dot_dimension_numbers<[1], [0], [0], [1], [0, 0, 1, 1], [], []>} : vector<64x8xf32>, vector<8x8xf32>, vector<64x8xf32> -> vector<64x8xf32>
    %c0_42 = arith.constant 0 : index
    %c0_43 = arith.constant 0 : index
    %22 = vector.load %arg7[%c0_42, %c0_43] : memref<1x8xf32, #tpu.memory_space<vmem>>, vector<1x8xf32>
    %23 = vector.broadcast %22 : vector<1x8xf32> to vector<64x8xf32>
    %24 = arith.addf %21, %23 : vector<64x8xf32>
    %cst_44 = arith.constant 0.000000e+00 : f32
    %25 = vector.broadcast %cst_44 : f32 to vector<1x1x10x8xf32>
    %cst_45 = arith.constant 0.000000e+00 : f32
    %26 = vector.broadcast %cst_45 : f32 to vector<1x10x1x8xf32>
    %c0_46 = arith.constant 0 : index
    %c0_47 = arith.constant 0 : index
    %c0_48 = arith.constant 0 : index
    %c0_49 = arith.constant 0 : index
    %27 = vector.load %arg9[%c0_46, %c0_47, %c0_48, %c0_49] : memref<1x10x10x8xf32, #tpu.memory_space<vmem>>, vector<1x1x10x8xf32>
    tpu.vector_store %arg9[%c0_46, %c0_47, %c0_48, %c0_49], %25 {strides = array<i32>} : memref<1x10x10x8xf32, #tpu.memory_space<vmem>>, vector<1x1x10x8xf32>,
    %c0_50 = arith.constant 0 : index
    %c9_51 = arith.constant 9 : index
    %c0_52 = arith.constant 0 : index
    %c0_53 = arith.constant 0 : index
    %28 = vector.load %arg9[%c0_50, %c9_51, %c0_52, %c0_53] : memref<1x10x10x8xf32, #tpu.memory_space<vmem>>, vector<1x1x10x8xf32>
    tpu.vector_store %arg9[%c0_50, %c9_51, %c0_52, %c0_53], %25 {strides = array<i32>} : memref<1x10x10x8xf32, #tpu.memory_space<vmem>>, vector<1x1x10x8xf32>,
    %c0_54 = arith.constant 0 : index
    %c0_55 = arith.constant 0 : index
    %c0_56 = arith.constant 0 : index
    %c0_57 = arith.constant 0 : index
    %29 = vector.load %arg9[%c0_54, %c0_55, %c0_56, %c0_57] : memref<1x10x10x8xf32, #tpu.memory_space<vmem>>, vector<1x10x1x8xf32>
    tpu.vector_store %arg9[%c0_54, %c0_55, %c0_56, %c0_57], %26 {strides = array<i32>} : memref<1x10x10x8xf32, #tpu.memory_space<vmem>>, vector<1x10x1x8xf32>,
    %c0_58 = arith.constant 0 : index
    %c0_59 = arith.constant 0 : index
    %c9_60 = arith.constant 9 : index
    %c0_61 = arith.constant 0 : index
    %30 = vector.load %arg9[%c0_58, %c0_59, %c9_60, %c0_61] : memref<1x10x10x8xf32, #tpu.memory_space<vmem>>, vector<1x10x1x8xf32>
    tpu.vector_store %arg9[%c0_58, %c0_59, %c9_60, %c0_61], %26 {strides = array<i32>} : memref<1x10x10x8xf32, #tpu.memory_space<vmem>>, vector<1x10x1x8xf32>,
    %31 = vector.shape_cast %17 : vector<64x8xf32> to vector<1x8x8x8xf32>
    %c0_62 = arith.constant 0 : index
    %c1_63 = arith.constant 1 : index
    %c1_64 = arith.constant 1 : index
    %c0_65 = arith.constant 0 : index
    %32 = vector.load %arg9[%c0_62, %c1_63, %c1_64, %c0_65] : memref<1x10x10x8xf32, #tpu.memory_space<vmem>>, vector<1x8x8x8xf32>
    tpu.vector_store %arg9[%c0_62, %c1_63, %c1_64, %c0_65], %31 {strides = array<i32>} : memref<1x10x10x8xf32, #tpu.memory_space<vmem>>, vector<1x8x8x8xf32>,
    %c0_66 = arith.constant 0 : index
    %c0_67 = arith.constant 0 : index
    %c0_68 = arith.constant 0 : index
    %c0_69 = arith.constant 0 : index
    %33 = vector.load %arg9[%c0_66, %c0_67, %c0_68, %c0_69] : memref<1x10x10x8xf32, #tpu.memory_space<vmem>>, vector<1x8x8x8xf32>
    %c0_70 = arith.constant 0 : index
    %c0_71 = arith.constant 0 : index
    %c1_72 = arith.constant 1 : index
    %c0_73 = arith.constant 0 : index
    %34 = vector.load %arg9[%c0_70, %c0_71, %c1_72, %c0_73] : memref<1x10x10x8xf32, #tpu.memory_space<vmem>>, vector<1x8x8x8xf32>
    %c0_74 = arith.constant 0 : index
    %c0_75 = arith.constant 0 : index
    %c2 = arith.constant 2 : index
    %c0_76 = arith.constant 0 : index
    %35 = vector.load %arg9[%c0_74, %c0_75, %c2, %c0_76] : memref<1x10x10x8xf32, #tpu.memory_space<vmem>>, vector<1x8x8x8xf32>
    %c0_77 = arith.constant 0 : index
    %c1_78 = arith.constant 1 : index
    %c0_79 = arith.constant 0 : index
    %c0_80 = arith.constant 0 : index
    %36 = vector.load %arg9[%c0_77, %c1_78, %c0_79, %c0_80] : memref<1x10x10x8xf32, #tpu.memory_space<vmem>>, vector<1x8x8x8xf32>
    %c0_81 = arith.constant 0 : index
    %c1_82 = arith.constant 1 : index
    %c1_83 = arith.constant 1 : index
    %c0_84 = arith.constant 0 : index
    %37 = vector.load %arg9[%c0_81, %c1_82, %c1_83, %c0_84] : memref<1x10x10x8xf32, #tpu.memory_space<vmem>>, vector<1x8x8x8xf32>
    %c0_85 = arith.constant 0 : index
    %c1_86 = arith.constant 1 : index
    %c2_87 = arith.constant 2 : index
    %c0_88 = arith.constant 0 : index
    %38 = vector.load %arg9[%c0_85, %c1_86, %c2_87, %c0_88] : memref<1x10x10x8xf32, #tpu.memory_space<vmem>>, vector<1x8x8x8xf32>
    %c0_89 = arith.constant 0 : index
    %c2_90 = arith.constant 2 : index
    %c0_91 = arith.constant 0 : index
    %c0_92 = arith.constant 0 : index
    %39 = vector.load %arg9[%c0_89, %c2_90, %c0_91, %c0_92] : memref<1x10x10x8xf32, #tpu.memory_space<vmem>>, vector<1x8x8x8xf32>
    %c0_93 = arith.constant 0 : index
    %c2_94 = arith.constant 2 : index
    %c1_95 = arith.constant 1 : index
    %c0_96 = arith.constant 0 : index
    %40 = vector.load %arg9[%c0_93, %c2_94, %c1_95, %c0_96] : memref<1x10x10x8xf32, #tpu.memory_space<vmem>>, vector<1x8x8x8xf32>
    %c0_97 = arith.constant 0 : index
    %c2_98 = arith.constant 2 : index
    %c2_99 = arith.constant 2 : index
    %c0_100 = arith.constant 0 : index
    %41 = vector.load %arg9[%c0_97, %c2_98, %c2_99, %c0_100] : memref<1x10x10x8xf32, #tpu.memory_space<vmem>>, vector<1x8x8x8xf32>
    %42 = tpu.concatenate %33, %34, %35, %36, %37, %38, %39, %40, %41 in 3 : vector<1x8x8x8xf32>, vector<1x8x8x8xf32>, vector<1x8x8x8xf32>, vector<1x8x8x8xf32>, vector<1x8x8x8xf32>, vector<1x8x8x8xf32>, vector<1x8x8x8xf32>, vector<1x8x8x8xf32>, vector<1x8x8x8xf32> -> vector<1x8x8x72xf32>
    %43 = vector.shape_cast %42 : vector<1x8x8x72xf32> to vector<64x72xf32>
    %c0_101 = arith.constant 0 : index
    %c0_102 = arith.constant 0 : index
    %44 = vector.load %arg4[%c0_101, %c0_102] : memref<72x8xf32, #tpu.memory_space<vmem>>, vector<72x8xf32>
    %cst_103 = arith.constant dense<0.000000e+00> : vector<64x8xf32>
    %45 = tpu.matmul %43, %44, %cst_103 {dimension_numbers = #tpu.dot_dimension_numbers<[1], [0], [0], [1], [0, 0, 1, 1], [], []>} : vector<64x72xf32>, vector<72x8xf32>, vector<64x8xf32> -> vector<64x8xf32>
    %46 = arith.addf %24, %45 : vector<64x8xf32>
    %c0_104 = arith.constant 0 : index
    %c0_105 = arith.constant 0 : index
    %47 = vector.load %arg5[%c0_104, %c0_105] : memref<1x8xf32, #tpu.memory_space<vmem>>, vector<1x8xf32>
    %48 = vector.broadcast %47 : vector<1x8xf32> to vector<64x8xf32>
    %49 = arith.addf %46, %48 : vector<64x8xf32>
    %cst_106 = arith.constant 0.000000e+00 : f32
    %50 = vector.broadcast %cst_106 : f32 to vector<64x8xf32>
    %51 = arith.maximumf %49, %50 : vector<64x8xf32>
    %52 = vector.shape_cast %51 : vector<64x8xf32> to vector<1x64x8xf32>
    %53 = tpu.transpose %52, [0, 2, 1] : vector<1x64x8xf32> -> vector<1x8x64xf32>
    %c0_107 = arith.constant 0 : index
    %c0_108 = arith.constant 0 : index
    %c0_109 = arith.constant 0 : index
    %54 = vector.load %arg8[%c0_107, %c0_108, %c0_109] : memref<1x8x64xf32, #tpu.memory_space<vmem>>, vector<1x8x64xf32>
    tpu.vector_store %arg8[%c0_107, %c0_108, %c0_109], %53 {strides = array<i32>} : memref<1x8x64xf32, #tpu.memory_space<vmem>>, vector<1x8x64xf32>,
    return
  }
  func.func @transform_0(%arg0: i32) -> (i32, i32, i32, i32) {
    %c0_i32 = arith.constant 0 : i32
    %c0_i32_0 = arith.constant 0 : i32
    %c0_i32_1 = arith.constant 0 : i32
    %c0_i32_2 = arith.constant 0 : i32
    return %arg0, %c0_i32, %c0_i32_0, %c0_i32_1 : i32, i32, i32, i32
  }
  func.func @transform_1(%arg0: i32) -> (i32, i32) {
    %c0_i32 = arith.constant 0 : i32
    %c0_i32_0 = arith.constant 0 : i32
    %c0_i32_1 = arith.constant 0 : i32
    return %c0_i32, %c0_i32_0 : i32, i32
  }
  func.func @transform_2(%arg0: i32) -> (i32, i32) {
    %c0_i32 = arith.constant 0 : i32
    %c0_i32_0 = arith.constant 0 : i32
    %c0_i32_1 = arith.constant 0 : i32
    return %c0_i32, %c0_i32_0 : i32, i32
  }
  func.func @transform_3(%arg0: i32) -> (i32, i32) {
    %c0_i32 = arith.constant 0 : i32
    %c0_i32_0 = arith.constant 0 : i32
    %c0_i32_1 = arith.constant 0 : i32
    return %c0_i32, %c0_i32_0 : i32, i32
  }
  func.func @transform_4(%arg0: i32) -> (i32, i32) {
    %c0_i32 = arith.constant 0 : i32
    %c0_i32_0 = arith.constant 0 : i32
    %c0_i32_1 = arith.constant 0 : i32
    return %c0_i32, %c0_i32_0 : i32, i32
  }
  func.func @transform_5(%arg0: i32) -> (i32, i32) {
    %c0_i32 = arith.constant 0 : i32
    %c0_i32_0 = arith.constant 0 : i32
    %c0_i32_1 = arith.constant 0 : i32
    return %c0_i32, %c0_i32_0 : i32, i32
  }
  func.func @transform_6(%arg0: i32) -> (i32, i32) {
    %c0_i32 = arith.constant 0 : i32
    %c0_i32_0 = arith.constant 0 : i32
    %c0_i32_1 = arith.constant 0 : i32
    return %c0_i32, %c0_i32_0 : i32, i32
  }
  func.func @transform_7(%arg0: i32) -> (i32, i32, i32) {
    %c0_i32 = arith.constant 0 : i32
    %c0_i32_0 = arith.constant 0 : i32
    %c0_i32_1 = arith.constant 0 : i32
    return %arg0, %c0_i32, %c0_i32_0 : i32, i32, i32
  }
}

</mosaic_0001>

<llo_original>
// kernel: basic_block_forward.1
$region0: #{basic_block_forward.1}
  #allocation0 [shape = 'u32[]', space=smem, size = 0x4, offset = 0x4, fixed_abs, tag = 'smem constant byte address 0x4 - core index']
  #allocation1 [shape = 'u32[72,128]{1,0:T(1,128)}', space=vmem, size = 0x9000, scoped, tag = 'internal scratch']
  #allocation2 [shape = 'f32[1,10,10,8]{3,2,1,0:T(8,128)}', space=vmem, size = 0x14000, scoped, tag = 'scratch operand']
  %s0 = inlined_call_operand.vmem [shape: f32[2,36,9,8], index: 0, kind: input, shape index: {}]
  %s1 = inlined_call_operand.vmem [shape: f32[72,8], index: 1, kind: input, shape index: {}]
  %s2 = inlined_call_operand.vmem [shape: f32[1,8], index: 2, kind: input, shape index: {}]
  %s3 = inlined_call_operand.vmem [shape: f32[72,8], index: 3, kind: input, shape index: {}]
  %s4 = inlined_call_operand.vmem [shape: f32[1,8], index: 4, kind: input, shape index: {}]
  %s5 = inlined_call_operand.vmem [shape: f32[8,8], index: 5, kind: input, shape index: {}]
  %s6 = inlined_call_operand.vmem [shape: f32[1,8], index: 6, kind: input, shape index: {}]
  %s7 = inlined_call_operand.vmem [shape: f32[2,8,64], index: 7, kind: output, shape index: {}]
  %s8 = sld [smem:[#allocation0]]
  $region61: #{basic_block_forward.1} parent=0
    _
  %s10 = ssub.s32 1, %s8
  %s11 = scalar_select 0, %s10, %s8
  loop: start=0, step=1, limit=4
  $region2: #{basic_block_forward.1} parent=0 // loop_pre_header
    _
  $region3: #{basic_block_forward.1} parent=0 // loop_header
    %s13 = sphi 0, %s17
    %p14 = scmp.ge.s32.totalorder %s13, 4
    %s23 = sphi 0, %s25
    %s26 = sphi 0, %s23
    %s27 = sphi 0, %s26
    %s43 = sphi 0, %s27
    %s47 = sphi 0, %s47
    %s49 = sphi 0, %s47
    %s50 = sphi 0, %s49
    %s64 = sphi 0, %s50
    %s68 = sphi 0, %s68
    %s70 = sphi 0, %s68
    %s71 = sphi 0, %s70
    %s85 = sphi 0, %s71
    %s89 = sphi 0, %s89
    %s91 = sphi 0, %s89
    %s92 = sphi 0, %s91
    %s106 = sphi 0, %s92
    %s110 = sphi 0, %s110
    %s112 = sphi 0, %s110
    %s113 = sphi 0, %s112
    %s127 = sphi 0, %s113
    %s131 = sphi 0, %s131
    %s133 = sphi 0, %s131
    %s134 = sphi 0, %s133
    %s148 = sphi 0, %s134
    %s152 = sphi 0, %s152
    %s154 = sphi 0, %s152
    %s155 = sphi 0, %s154
    %s169 = sphi 0, %s155
    %s175 = sphi 0, %s177
    %s178 = sphi 0, %s175
    %s179 = sphi 0, %s178
    %s195 = sphi 0, %s179
  $region4: #{basic_block_forward.1} parent=0 // loop_header_branch
    %16 = sbr.rel (%p14) target = $region8
  $region5: #{basic_block_forward.1} parent=0 // loop_body
    %s18 = ssub.s32 %s13, 1
    %s19 = ssub.s32 %s13, 2
    %s20 = sadd.s32 %s13, 1
    %s21 = ssub.s32 %s13, %s20
    %p22 = scmp.eq.s32.totalorder %s21, 0
    %s24 = sadd.s32 %s23, 1
    %s25 = scalar_select %p22, %s23, %s24
    %p28 = pneg %p22
    %p29 = scmp.eq.s32.totalorder %s13, 1
    %p30 = por %p28, %p29
    %p31 = scmp.ne.s32.totalorder %s23, %s26
    %p32 = scmp.eq.s32.totalorder %s13, 0
    %p33 = por %p31, %p32
    %p34 = scmp.ne.s32.totalorder %s23, %s26
    %p35 = scmp.eq.s32.totalorder %s18, 1
    %p36 = por %p34, %p35
    %p37 = scmp.ne.s32.totalorder %s26, %s27
    %p38 = scmp.eq.s32.totalorder %s18, 0
    %p39 = por %p37, %p38
    %p40 = scmp.ne.s32.totalorder %s26, %s27
    %p41 = scmp.eq.s32.totalorder %s19, 1
    %p42 = por %p40, %p41
    %p44 = scmp.ne.s32.totalorder %s27, %s43
    %p45 = scmp.eq.s32.totalorder %s19, 0
    %p46 = por %p44, %p45
    %s48 = sadd.s32 %s47, 1
    %p51 = scmp.eq.s32.totalorder %s13, 1
    %p52 = scmp.ne.s32.totalorder %s47, %s49
    %p53 = scmp.eq.s32.totalorder %s13, 0
    %p54 = por %p52, %p53
    %p55 = scmp.ne.s32.totalorder %s47, %s49
    %p56 = scmp.eq.s32.totalorder %s18, 1
    %p57 = por %p55, %p56
    %p58 = scmp.ne.s32.totalorder %s49, %s50
    %p59 = scmp.eq.s32.totalorder %s18, 0
    %p60 = por %p58, %p59
    %p61 = scmp.ne.s32.totalorder %s49, %s50
    %p62 = scmp.eq.s32.totalorder %s19, 1
    %p63 = por %p61, %p62
    %p65 = scmp.ne.s32.totalorder %s50, %s64
    %p66 = scmp.eq.s32.totalorder %s19, 0
    %p67 = por %p65, %p66
    %s69 = sadd.s32 %s68, 1
    %p72 = scmp.eq.s32.totalorder %s13, 1
    %p73 = scmp.ne.s32.totalorder %s68, %s70
    %p74 = scmp.eq.s32.totalorder %s13, 0
    %p75 = por %p73, %p74
    %p76 = scmp.ne.s32.totalorder %s68, %s70
    %p77 = scmp.eq.s32.totalorder %s18, 1
    %p78 = por %p76, %p77
    %p79 = scmp.ne.s32.totalorder %s70, %s71
    %p80 = scmp.eq.s32.totalorder %s18, 0
    %p81 = por %p79, %p80
    %p82 = scmp.ne.s32.totalorder %s70, %s71
    %p83 = scmp.eq.s32.totalorder %s19, 1
    %p84 = por %p82, %p83
    %p86 = scmp.ne.s32.totalorder %s71, %s85
    %p87 = scmp.eq.s32.totalorder %s19, 0
    %p88 = por %p86, %p87
    %s90 = sadd.s32 %s89, 1
    %p93 = scmp.eq.s32.totalorder %s13, 1
    %p94 = scmp.ne.s32.totalorder %s89, %s91
    %p95 = scmp.eq.s32.totalorder %s13, 0
    %p96 = por %p94, %p95
    %p97 = scmp.ne.s32.totalorder %s89, %s91
    %p98 = scmp.eq.s32.totalorder %s18, 1
    %p99 = por %p97, %p98
    %p100 = scmp.ne.s32.totalorder %s91, %s92
    %p101 = scmp.eq.s32.totalorder %s18, 0
    %p102 = por %p100, %p101
    %p103 = scmp.ne.s32.totalorder %s91, %s92
    %p104 = scmp.eq.s32.totalorder %s19, 1
    %p105 = por %p103, %p104
    %p107 = scmp.ne.s32.totalorder %s92, %s106
    %p108 = scmp.eq.s32.totalorder %s19, 0
    %p109 = por %p107, %p108
    %s111 = sadd.s32 %s110, 1
    %p114 = scmp.eq.s32.totalorder %s13, 1
    %p115 = scmp.ne.s32.totalorder %s110, %s112
    %p116 = scmp.eq.s32.totalorder %s13, 0
    %p117 = por %p115, %p116
    %p118 = scmp.ne.s32.totalorder %s110, %s112
    %p119 = scmp.eq.s32.totalorder %s18, 1
    %p120 = por %p118, %p119
    %p121 = scmp.ne.s32.totalorder %s112, %s113
    %p122 = scmp.eq.s32.totalorder %s18, 0
    %p123 = por %p121, %p122
    %p124 = scmp.ne.s32.totalorder %s112, %s113
    %p125 = scmp.eq.s32.totalorder %s19, 1
    %p126 = por %p124, %p125
    %p128 = scmp.ne.s32.totalorder %s113, %s127
    %p129 = scmp.eq.s32.totalorder %s19, 0
    %p130 = por %p128, %p129
    %s132 = sadd.s32 %s131, 1
    %p135 = scmp.eq.s32.totalorder %s13, 1
    %p136 = scmp.ne.s32.totalorder %s131, %s133
    %p137 = scmp.eq.s32.totalorder %s13, 0
    %p138 = por %p136, %p137
    %p139 = scmp.ne.s32.totalorder %s131, %s133
    %p140 = scmp.eq.s32.totalorder %s18, 1
    %p141 = por %p139, %p140
    %p142 = scmp.ne.s32.totalorder %s133, %s134
    %p143 = scmp.eq.s32.totalorder %s18, 0
    %p144 = por %p142, %p143
    %p145 = scmp.ne.s32.totalorder %s133, %s134
    %p146 = scmp.eq.s32.totalorder %s19, 1
    %p147 = por %p145, %p146
    %p149 = scmp.ne.s32.totalorder %s134, %s148
    %p150 = scmp.eq.s32.totalorder %s19, 0
    %p151 = por %p149, %p150
    %s153 = sadd.s32 %s152, 1
    %p156 = scmp.eq.s32.totalorder %s13, 1
    %p157 = scmp.ne.s32.totalorder %s152, %s154
    %p158 = scmp.eq.s32.totalorder %s13, 0
    %p159 = por %p157, %p158
    %p160 = scmp.ne.s32.totalorder %s152, %s154
    %p161 = scmp.eq.s32.totalorder %s18, 1
    %p162 = por %p160, %p161
    %p163 = scmp.ne.s32.totalorder %s154, %s155
    %p164 = scmp.eq.s32.totalorder %s18, 0
    %p165 = por %p163, %p164
    %p166 = scmp.ne.s32.totalorder %s154, %s155
    %p167 = scmp.eq.s32.totalorder %s19, 1
    %p168 = por %p166, %p167
    %p170 = scmp.ne.s32.totalorder %s155, %s169
    %p171 = scmp.eq.s32.totalorder %s19, 0
    %p172 = por %p170, %p171
    %s173 = ssub.s32 %s13, %s20
    %p174 = scmp.eq.s32.totalorder %s173, 0
    %s176 = sadd.s32 %s175, 1
    %s177 = scalar_select %p174, %s175, %s176
    %p180 = pneg %p174
    %p181 = scmp.eq.s32.totalorder %s13, 1
    %p182 = por %p180, %p181
    %p183 = scmp.ne.s32.totalorder %s175, %s178
    %p184 = scmp.eq.s32.totalorder %s13, 0
    %p185 = por %p183, %p184
    %p186 = scmp.ne.s32.totalorder %s175, %s178
    %p187 = scmp.eq.s32.totalorder %s18, 1
    %p188 = por %p186, %p187
    %p189 = scmp.ne.s32.totalorder %s178, %s179
    %p190 = scmp.eq.s32.totalorder %s18, 0
    %p191 = por %p189, %p190
    %p192 = scmp.ne.s32.totalorder %s178, %s179
    %p193 = scmp.eq.s32.totalorder %s19, 1
    %p194 = por %p192, %p193
    %p196 = scmp.ne.s32.totalorder %s179, %s195
    %p197 = scmp.eq.s32.totalorder %s19, 0
    %p198 = por %p196, %p197
    %p199 = scmp.le.s32.totalorder 1, %s13
    %p200 = scmp.lt.s32.totalorder %s13, 3
    %p201 = pnand %p199, %p200
    %p202 = pneg %p201
    // Predicated region
    $region9: #{basic_block_forward.1} parent=5 // pred_check
      _
    $region10: #{basic_block_forward.1} parent=5 // pred_check_branch
      %204 = sbr.rel (%p201) target = $region12
    $region11: #{basic_block_forward.1} parent=5 // pred_region
      %s205 = ssub.s32 %s13, 1
      // Predicated region
      $region13: #{basic_block_forward.1} parent=11 // pred_check
        %p206 = pneg %p60
      $region14: #{basic_block_forward.1} parent=11 // pred_check_branch
        %208 = sbr.rel (%p206) target = $region16
      $region15: #{basic_block_forward.1} parent=11 // pred_region
        _
      $region16: #{basic_block_forward.1} parent=11 // pred_fallthru
        _
      // Predicated region
      $region17: #{basic_block_forward.1} parent=11 // pred_check
        %p209 = pneg %p81
      $region18: #{basic_block_forward.1} parent=11 // pred_check_branch
        %211 = sbr.rel (%p209) target = $region20
      $region19: #{basic_block_forward.1} parent=11 // pred_region
        _
      $region20: #{basic_block_forward.1} parent=11 // pred_fallthru
        _
      // Predicated region
      $region21: #{basic_block_forward.1} parent=11 // pred_check
        %p212 = pneg %p102
      $region22: #{basic_block_forward.1} parent=11 // pred_check_branch
        %214 = sbr.rel (%p212) target = $region24
      $region23: #{basic_block_forward.1} parent=11 // pred_region
        _
      $region24: #{basic_block_forward.1} parent=11 // pred_fallthru
        _
      // Predicated region
      $region25: #{basic_block_forward.1} parent=11 // pred_check
        %p215 = pneg %p123
      $region26: #{basic_block_forward.1} parent=11 // pred_check_branch
        %217 = sbr.rel (%p215) target = $region28
      $region27: #{basic_block_forward.1} parent=11 // pred_region
        _
      $region28: #{basic_block_forward.1} parent=11 // pred_fallthru
        _
      // Predicated region
      $region29: #{basic_block_forward.1} parent=11 // pred_check
        %p218 = pneg %p144
      $region30: #{basic_block_forward.1} parent=11 // pred_check_branch
        %220 = sbr.rel (%p218) target = $region32
      $region31: #{basic_block_forward.1} parent=11 // pred_region
        _
      $region32: #{basic_block_forward.1} parent=11 // pred_fallthru
        _
      // Predicated region
      $region33: #{basic_block_forward.1} parent=11 // pred_check
        %p221 = pneg %p165
      $region34: #{basic_block_forward.1} parent=11 // pred_check_branch
        %223 = sbr.rel (%p221) target = $region36
      $region35: #{basic_block_forward.1} parent=11 // pred_region
        _
      $region36: #{basic_block_forward.1} parent=11 // pred_fallthru
        _
    $region12: #{basic_block_forward.1} parent=5 // pred_fallthru
      _
    %p224 = scmp.lt.s32.totalorder %s13, 2
    // Predicated region
    $region37: #{basic_block_forward.1} parent=5 // pred_check
      %p225 = pneg %p224
    $region38: #{basic_block_forward.1} parent=5 // pred_check_branch
      %227 = sbr.rel (%p225) target = $region40
    $region39: #{basic_block_forward.1} parent=5 // pred_region
      // Predicated region
      $region41: #{basic_block_forward.1} parent=39 // pred_check
        %p228 = pneg %p33
      $region42: #{basic_block_forward.1} parent=39 // pred_check_branch
        %230 = sbr.rel (%p228) target = $region44
      $region43: #{basic_block_forward.1} parent=39 // pred_region
        %p231 = scmp.lt.s32.totalorder %s13, 1
        %s232 = scalar_select %p231, %s13, 1
        %s233 = smul.addr %s232, 72
        %s234 = smul.addr %s233, 8
        %s235 = scalar_lea.vmem %s0, %s234
      $region44: #{basic_block_forward.1} parent=39 // pred_fallthru
        _
    $region40: #{basic_block_forward.1} parent=5 // pred_fallthru
      _
    %p236 = scmp.le.s32.totalorder 1, %s13
    %p237 = scmp.lt.s32.totalorder %s13, 3
    %p238 = pnand %p236, %p237
    %p239 = pneg %p238
    // Predicated region
    $region45: #{basic_block_forward.1} parent=5 // pred_check
      _
    $region46: #{basic_block_forward.1} parent=5 // pred_check_branch
      %241 = sbr.rel (%p238) target = $region48
    $region47: #{basic_block_forward.1} parent=5 // pred_region
      %s242 = ssub.s32 %s13, 1
      %p243 = scmp.lt.s32.totalorder %s18, 1
      %s244 = scalar_select %p243, %s18, 1
      %s245 = smul.addr %s244, 72
      %s246 = smul.addr %s245, 8
      %s247 = scalar_lea.vmem %s0, %s246
      %p248 = pneg %p39
      %p249 = pneg %p36
      %p250 = pneg %p60
      %p251 = pneg %p57
      %p252 = pneg %p81
      %p253 = pneg %p78
      %p254 = pneg %p102
      %p255 = pneg %p99
      %p256 = pneg %p123
      %p257 = pneg %p120
      %p258 = pneg %p144
      %p259 = pneg %p141
      %p260 = pneg %p165
      %p261 = pneg %p162
      %p262 = pneg %p191
      %p263 = pneg %p188
      %p264 = scmp.lt.s32.totalorder %s18, 1
      %s265 = scalar_select %p264, %s18, 1
      %s266 = smul.addr %s265, 8
      %s267 = scalar_lea.vmem %s7, %s266
      %p268 = scmp.lt.s32.totalorder %s18, 1
      %s269 = scalar_select %p268, %s18, 1
      %s270 = smul.addr %s269, 72
      %s271 = smul.addr %s270, 8
      %s272 = scalar_lea.vmem %s0, %s271
      %p273 = scmp.lt.s32.totalorder %s18, 1
      %s274 = scalar_select %p273, %s18, 1
      %s275 = smul.addr %s274, 8
      %s276 = scalar_lea.vmem %s7, %s275
      %v277 = vld [vmem:[%s272] sm:$0xff]
      %v278 = vld [vmem:[%s272 + $0x10] sm:$0xff]
      %v279 = vld [vmem:[%s272 + $0x20] sm:$0xff]
      %v280 = vld [vmem:[%s272 + $0x30] sm:$0xff]
      %v281 = vld [vmem:[%s272 + $0x40] sm:$0xff]
      %v282 = vld [vmem:[%s272 + $0x50] sm:$0xff]
      %v283 = vld [vmem:[%s272 + $0x60] sm:$0xff]
      %v284 = vld [vmem:[%s272 + $0x70] sm:$0xff]
      %s285 = scalar_lea.vmem %s272, 144
      %v286 = vld [vmem:[%s285] sm:$0xff]
      %v287 = vld [vmem:[%s285 + $0x10] sm:$0xff]
      %v288 = vld [vmem:[%s285 + $0x20] sm:$0xff]
      %v289 = vld [vmem:[%s285 + $0x30] sm:$0xff]
      %v290 = vld [vmem:[%s285 + $0x40] sm:$0xff]
      %v291 = vld [vmem:[%s285 + $0x50] sm:$0xff]
      %v292 = vld [vmem:[%s285 + $0x60] sm:$0xff]
      %v293 = vld [vmem:[%s285 + $0x70] sm:$0xff]
      %v294 = vld [vmem:[%s272 + $0x1] sm:$0xff]
      %v295 = vld [vmem:[%s272 + $0x11] sm:$0xff]
      %v296 = vld [vmem:[%s272 + $0x21] sm:$0xff]
      %v297 = vld [vmem:[%s272 + $0x31] sm:$0xff]
      %v298 = vld [vmem:[%s272 + $0x41] sm:$0xff]
      %v299 = vld [vmem:[%s272 + $0x51] sm:$0xff]
      %v300 = vld [vmem:[%s272 + $0x61] sm:$0xff]
      %v301 = vld [vmem:[%s272 + $0x71] sm:$0xff]
      %s302 = scalar_lea.vmem %s272, 288
      %v303 = vld [vmem:[%s302] sm:$0xff]
      %v304 = vld [vmem:[%s302 + $0x10] sm:$0xff]
      %v305 = vld [vmem:[%s302 + $0x20] sm:$0xff]
      %v306 = vld [vmem:[%s302 + $0x30] sm:$0xff]
      %v307 = vld [vmem:[%s302 + $0x40] sm:$0xff]
      %v308 = vld [vmem:[%s302 + $0x50] sm:$0xff]
      %v309 = vld [vmem:[%s302 + $0x60] sm:$0xff]
      %v310 = vld [vmem:[%s302 + $0x70] sm:$0xff]
      %s311 = scalar_lea.vmem %s272, 432
      %v312 = vld [vmem:[%s311] sm:$0xff]
      %v313 = vld [vmem:[%s311 + $0x10] sm:$0xff]
      %v314 = vld [vmem:[%s311 + $0x20] sm:$0xff]
      %v315 = vld [vmem:[%s311 + $0x30] sm:$0xff]
      %v316 = vld [vmem:[%s311 + $0x40] sm:$0xff]
      %v317 = vld [vmem:[%s311 + $0x50] sm:$0xff]
      %v318 = vld [vmem:[%s311 + $0x60] sm:$0xff]
      %v319 = vld [vmem:[%s311 + $0x70] sm:$0xff]
      %v320 = vld [vmem:[%s302 + $0x1] sm:$0xff]
      %v321 = vld [vmem:[%s302 + $0x11] sm:$0xff]
      %v322 = vld [vmem:[%s302 + $0x21] sm:$0xff]
      %v323 = vld [vmem:[%s302 + $0x31] sm:$0xff]
      %v324 = vld [vmem:[%s302 + $0x41] sm:$0xff]
      %v325 = vld [vmem:[%s302 + $0x51] sm:$0xff]
      %v326 = vld [vmem:[%s302 + $0x61] sm:$0xff]
      %v327 = vld [vmem:[%s302 + $0x71] sm:$0xff]
      %s328 = scalar_lea.vmem %s272, 16
      %v329 = vld [vmem:[%s328] sm:$0xff]
      %v330 = vld [vmem:[%s328 + $0x10] sm:$0xff]
      %v331 = vld [vmem:[%s328 + $0x20] sm:$0xff]
      %v332 = vld [vmem:[%s328 + $0x30] sm:$0xff]
      %v333 = vld [vmem:[%s328 + $0x40] sm:$0xff]
      %v334 = vld [vmem:[%s328 + $0x50] sm:$0xff]
      %v335 = vld [vmem:[%s328 + $0x60] sm:$0xff]
      %v336 = vld [vmem:[%s328 + $0x70] sm:$0xff]
      %s337 = scalar_lea.vmem %s272, 160
      %v338 = vld [vmem:[%s337] sm:$0xff]
      %v339 = vld [vmem:[%s337 + $0x10] sm:$0xff]
      %v340 = vld [vmem:[%s337 + $0x20] sm:$0xff]
      %v341 = vld [vmem:[%s337 + $0x30] sm:$0xff]
      %v342 = vld [vmem:[%s337 + $0x40] sm:$0xff]
      %v343 = vld [vmem:[%s337 + $0x50] sm:$0xff]
      %v344 = vld [vmem:[%s337 + $0x60] sm:$0xff]
      %v345 = vld [vmem:[%s337 + $0x70] sm:$0xff]
      %v346 = vld [vmem:[%s328 + $0x1] sm:$0xff]
      %v347 = vld [vmem:[%s328 + $0x11] sm:$0xff]
      %v348 = vld [vmem:[%s328 + $0x21] sm:$0xff]
      %v349 = vld [vmem:[%s328 + $0x31] sm:$0xff]
      %v350 = vld [vmem:[%s328 + $0x41] sm:$0xff]
      %v351 = vld [vmem:[%s328 + $0x51] sm:$0xff]
      %v352 = vld [vmem:[%s328 + $0x61] sm:$0xff]
      %v353 = vld [vmem:[%s328 + $0x71] sm:$0xff]
      %362 = vrot.lane.b32.xlu0 %v286, 8
      %v363 = vpop.permute.xlu0 %362
      %364 = vrot.lane.b32.xlu0 %v287, 8
      %v365 = vpop.permute.xlu0 %364
      %366 = vrot.lane.b32.xlu0 %v288, 8
      %v367 = vpop.permute.xlu0 %366
      %368 = vrot.lane.b32.xlu0 %v289, 8
      %v369 = vpop.permute.xlu0 %368
      %370 = vrot.lane.b32.xlu0 %v290, 8
      %v371 = vpop.permute.xlu0 %370
      %372 = vrot.lane.b32.xlu0 %v291, 8
      %v373 = vpop.permute.xlu0 %372
      %374 = vrot.lane.b32.xlu0 %v292, 8
      %v375 = vpop.permute.xlu0 %374
      %376 = vrot.lane.b32.xlu0 %v293, 8
      %v377 = vpop.permute.xlu0 %376
      %394 = vrot.lane.b32.xlu0 %v294, 16
      %v395 = vpop.permute.xlu0 %394
      %396 = vrot.lane.b32.xlu0 %v295, 16
      %v397 = vpop.permute.xlu0 %396
      %398 = vrot.lane.b32.xlu0 %v296, 16
      %v399 = vpop.permute.xlu0 %398
      %400 = vrot.lane.b32.xlu0 %v297, 16
      %v401 = vpop.permute.xlu0 %400
      %402 = vrot.lane.b32.xlu0 %v298, 16
      %v403 = vpop.permute.xlu0 %402
      %404 = vrot.lane.b32.xlu0 %v299, 16
      %v405 = vpop.permute.xlu0 %404
      %406 = vrot.lane.b32.xlu0 %v300, 16
      %v407 = vpop.permute.xlu0 %406
      %408 = vrot.lane.b32.xlu0 %v301, 16
      %v409 = vpop.permute.xlu0 %408
      %426 = vrot.lane.b32.xlu0 %v303, 24
      %v427 = vpop.permute.xlu0 %426
      %428 = vrot.lane.b32.xlu0 %v304, 24
      %v429 = vpop.permute.xlu0 %428
      %430 = vrot.lane.b32.xlu0 %v305, 24
      %v431 = vpop.permute.xlu0 %430
      %432 = vrot.lane.b32.xlu0 %v306, 24
      %v433 = vpop.permute.xlu0 %432
      %434 = vrot.lane.b32.xlu0 %v307, 24
      %v435 = vpop.permute.xlu0 %434
      %436 = vrot.lane.b32.xlu0 %v308, 24
      %v437 = vpop.permute.xlu0 %436
      %438 = vrot.lane.b32.xlu0 %v309, 24
      %v439 = vpop.permute.xlu0 %438
      %440 = vrot.lane.b32.xlu0 %v310, 24
      %v441 = vpop.permute.xlu0 %440
      %458 = vrot.lane.b32.xlu0 %v312, 32
      %v459 = vpop.permute.xlu0 %458
      %460 = vrot.lane.b32.xlu0 %v313, 32
      %v461 = vpop.permute.xlu0 %460
      %462 = vrot.lane.b32.xlu0 %v314, 32
      %v463 = vpop.permute.xlu0 %462
      %464 = vrot.lane.b32.xlu0 %v315, 32
      %v465 = vpop.permute.xlu0 %464
      %466 = vrot.lane.b32.xlu0 %v316, 32
      %v467 = vpop.permute.xlu0 %466
      %468 = vrot.lane.b32.xlu0 %v317, 32
      %v469 = vpop.permute.xlu0 %468
      %470 = vrot.lane.b32.xlu0 %v318, 32
      %v471 = vpop.permute.xlu0 %470
      %472 = vrot.lane.b32.xlu0 %v319, 32
      %v473 = vpop.permute.xlu0 %472
      %490 = vrot.lane.b32.xlu0 %v320, 40
      %v491 = vpop.permute.xlu0 %490
      %492 = vrot.lane.b32.xlu0 %v321, 40
      %v493 = vpop.permute.xlu0 %492
      %494 = vrot.lane.b32.xlu0 %v322, 40
      %v495 = vpop.permute.xlu0 %494
      %496 = vrot.lane.b32.xlu0 %v323, 40
      %v497 = vpop.permute.xlu0 %496
      %498 = vrot.lane.b32.xlu0 %v324, 40
      %v499 = vpop.permute.xlu0 %498
      %500 = vrot.lane.b32.xlu0 %v325, 40
      %v501 = vpop.permute.xlu0 %500
      %502 = vrot.lane.b32.xlu0 %v326, 40
      %v503 = vpop.permute.xlu0 %502
      %504 = vrot.lane.b32.xlu0 %v327, 40
      %v505 = vpop.permute.xlu0 %504
      %522 = vrot.lane.b32.xlu0 %v329, 48
      %v523 = vpop.permute.xlu0 %522
      %524 = vrot.lane.b32.xlu0 %v330, 48
      %v525 = vpop.permute.xlu0 %524
      %526 = vrot.lane.b32.xlu0 %v331, 48
      %v527 = vpop.permute.xlu0 %526
      %528 = vrot.lane.b32.xlu0 %v332, 48
      %v529 = vpop.permute.xlu0 %528
      %530 = vrot.lane.b32.xlu0 %v333, 48
      %v531 = vpop.permute.xlu0 %530
      %532 = vrot.lane.b32.xlu0 %v334, 48
      %v533 = vpop.permute.xlu0 %532
      %534 = vrot.lane.b32.xlu0 %v335, 48
      %v535 = vpop.permute.xlu0 %534
      %536 = vrot.lane.b32.xlu0 %v336, 48
      %v537 = vpop.permute.xlu0 %536
      %554 = vrot.lane.b32.xlu0 %v338, 56
      %v555 = vpop.permute.xlu0 %554
      %556 = vrot.lane.b32.xlu0 %v339, 56
      %v557 = vpop.permute.xlu0 %556
      %558 = vrot.lane.b32.xlu0 %v340, 56
      %v559 = vpop.permute.xlu0 %558
      %560 = vrot.lane.b32.xlu0 %v341, 56
      %v561 = vpop.permute.xlu0 %560
      %562 = vrot.lane.b32.xlu0 %v342, 56
      %v563 = vpop.permute.xlu0 %562
      %564 = vrot.lane.b32.xlu0 %v343, 56
      %v565 = vpop.permute.xlu0 %564
      %566 = vrot.lane.b32.xlu0 %v344, 56
      %v567 = vpop.permute.xlu0 %566
      %568 = vrot.lane.b32.xlu0 %v345, 56
      %v569 = vpop.permute.xlu0 %568
      %586 = vrot.lane.b32.xlu0 %v346, 64
      %v587 = vpop.permute.xlu0 %586
      %588 = vrot.lane.b32.xlu0 %v347, 64
      %v589 = vpop.permute.xlu0 %588
      %590 = vrot.lane.b32.xlu0 %v348, 64
      %v591 = vpop.permute.xlu0 %590
      %592 = vrot.lane.b32.xlu0 %v349, 64
      %v593 = vpop.permute.xlu0 %592
      %594 = vrot.lane.b32.xlu0 %v350, 64
      %v595 = vpop.permute.xlu0 %594
      %596 = vrot.lane.b32.xlu0 %v351, 64
      %v597 = vpop.permute.xlu0 %596
      %598 = vrot.lane.b32.xlu0 %v352, 64
      %v599 = vpop.permute.xlu0 %598
      %600 = vrot.lane.b32.xlu0 %v353, 64
      %v601 = vpop.permute.xlu0 %600
      %vm610 = vcmask 64512
      %v611 = vsel %vm610, %v277, %v363
      %v612 = vsel %vm610, %v278, %v365
      %v613 = vsel %vm610, %v279, %v367
      %v614 = vsel %vm610, %v280, %v369
      %v615 = vsel %vm610, %v281, %v371
      %v616 = vsel %vm610, %v282, %v373
      %v617 = vsel %vm610, %v283, %v375
      %v618 = vsel %vm610, %v284, %v377
      %vm619 = vcmask 130048
      %v620 = vsel %vm619, %v611, %v395
      %v621 = vsel %vm619, %v612, %v397
      %v622 = vsel %vm619, %v613, %v399
      %v623 = vsel %vm619, %v614, %v401
      %v624 = vsel %vm619, %v615, %v403
      %v625 = vsel %vm619, %v616, %v405
      %v626 = vsel %vm619, %v617, %v407
      %v627 = vsel %vm619, %v618, %v409
      %vm628 = vcmask 195584
      %v629 = vsel %vm628, %v620, %v427
      %v630 = vsel %vm628, %v621, %v429
      %v631 = vsel %vm628, %v622, %v431
      %v632 = vsel %vm628, %v623, %v433
      %v633 = vsel %vm628, %v624, %v435
      %v634 = vsel %vm628, %v625, %v437
      %v635 = vsel %vm628, %v626, %v439
      %v636 = vsel %vm628, %v627, %v441
      %vm637 = vcmask 261120
      %v638 = vsel %vm637, %v629, %v459
      %v639 = vsel %vm637, %v630, %v461
      %v640 = vsel %vm637, %v631, %v463
      %v641 = vsel %vm637, %v632, %v465
      %v642 = vsel %vm637, %v633, %v467
      %v643 = vsel %vm637, %v634, %v469
      %v644 = vsel %vm637, %v635, %v471
      %v645 = vsel %vm637, %v636, %v473
      %vm646 = vcmask 326656
      %v647 = vsel %vm646, %v638, %v491
      %v648 = vsel %vm646, %v639, %v493
      %v649 = vsel %vm646, %v640, %v495
      %v650 = vsel %vm646, %v641, %v497
      %v651 = vsel %vm646, %v642, %v499
      %v652 = vsel %vm646, %v643, %v501
      %v653 = vsel %vm646, %v644, %v503
      %v654 = vsel %vm646, %v645, %v505
      %vm655 = vcmask 392192
      %v656 = vsel %vm655, %v647, %v523
      %v657 = vsel %vm655, %v648, %v525
      %v658 = vsel %vm655, %v649, %v527
      %v659 = vsel %vm655, %v650, %v529
      %v660 = vsel %vm655, %v651, %v531
      %v661 = vsel %vm655, %v652, %v533
      %v662 = vsel %vm655, %v653, %v535
      %v663 = vsel %vm655, %v654, %v537
      %vm664 = vcmask 457728
      %v665 = vsel %vm664, %v656, %v555
      %v666 = vsel %vm664, %v657, %v557
      %v667 = vsel %vm664, %v658, %v559
      %v668 = vsel %vm664, %v659, %v561
      %v669 = vsel %vm664, %v660, %v563
      %v670 = vsel %vm664, %v661, %v565
      %v671 = vsel %vm664, %v662, %v567
      %v672 = vsel %vm664, %v663, %v569
      %vm673 = vcmask 523264
      %v674 = vsel %vm673, %v665, %v587
      %v675 = vsel %vm673, %v666, %v589
      %v676 = vsel %vm673, %v667, %v591
      %v677 = vsel %vm673, %v668, %v593
      %v678 = vsel %vm673, %v669, %v595
      %v679 = vsel %vm673, %v670, %v597
      %v680 = vsel %vm673, %v671, %v599
      %v681 = vsel %vm673, %v672, %v601
      %v682 = vld [vmem:[%s1] sm:$0xff]
      %v683 = vld [vmem:[%s1 + $0x8] sm:$0xff]
      %v684 = vld [vmem:[%s1 + $0x10] sm:$0xff]
      %v685 = vld [vmem:[%s1 + $0x18] sm:$0xff]
      %v686 = vld [vmem:[%s1 + $0x20] sm:$0xff]
      %v687 = vld [vmem:[%s1 + $0x28] sm:$0xff]
      %v688 = vld [vmem:[%s1 + $0x30] sm:$0xff]
      %v689 = vld [vmem:[%s1 + $0x38] sm:$0xff]
      %v690 = vld [vmem:[%s1 + $0x40] sm:$0xff]
      %v691 = vld [vmem:[%s2] sm:$0x1]
      %v693 = vperm.slane %v691, 0
      %vm695 = vcmask 588800
      %v697 = vsel %vm695, %v674, 0
      %v700 = vsel %vm695, %v675, 0
      %v703 = vsel %vm695, %v676, 0
      %v706 = vsel %vm695, %v677, 0
      %v709 = vsel %vm695, %v678, 0
      %v712 = vsel %vm695, %v679, 0
      %v715 = vsel %vm695, %v680, 0
      %v718 = vsel %vm695, %v681, 0
      %720 = vmatpush.msra.mxu0 0.0
      %721 = vmatpush.msra.mxu0 0.0
      %722 = vmatpush.msra.mxu0 0.0
      %723 = vmatpush.msra.mxu0 0.0
      %724 = vmatpush.msra.mxu0 0.0
      %725 = vmatpush.msra.mxu0 0.0
      %726 = vmatpush.msra.mxu0 0.0
      %727 = vmatpush.msra.mxu0 %v690
      %728 = vmatpush.msra.mxu0 %v689
      %729 = vmatpush.msra.mxu0 %v688
      %730 = vmatpush.msra.mxu0 %v687
      %731 = vmatpush.msra.mxu0 %v686
      %732 = vmatpush.msra.mxu0 %v685
      %733 = vmatpush.msra.mxu0 %v684
      %734 = vmatpush.msra.mxu0 %v683
      %735 = vmatpush.msra.mxu0 %v682
      %736 = vmatmul.f32.gmra.mxu0 %v697
      %v737 = vpop.f32.mrf.mxu0
      %v738 = vadd.f32 %v693, %v737
      %739 = vmatmul.f32.gmra.mxu0 %v700
      %v740 = vpop.f32.mrf.mxu0
      %v741 = vadd.f32 %v693, %v740
      %742 = vmatmul.f32.gmra.mxu0 %v703
      %v743 = vpop.f32.mrf.mxu0
      %v744 = vadd.f32 %v693, %v743
      %745 = vmatmul.f32.gmra.mxu0 %v706
      %v746 = vpop.f32.mrf.mxu0
      %v747 = vadd.f32 %v693, %v746
      %748 = vmatmul.f32.gmra.mxu0 %v709
      %v749 = vpop.f32.mrf.mxu0
      %v750 = vadd.f32 %v693, %v749
      %751 = vmatmul.f32.gmra.mxu0 %v712
      %v752 = vpop.f32.mrf.mxu0
      %v753 = vadd.f32 %v693, %v752
      %754 = vmatmul.f32.gmra.mxu0 %v715
      %v755 = vpop.f32.mrf.mxu0
      %v756 = vadd.f32 %v693, %v755
      %757 = vmatmul.f32.gmra.mxu0 %v718
      %v758 = vpop.f32.mrf.mxu0
      %v759 = vadd.f32 %v693, %v758
      %760 = vdwg.mxu0
      %v761 = vmax.f32 %v738, 0.0
      %v762 = vmax.f32 %v741, 0.0
      %v763 = vmax.f32 %v744, 0.0
      %v764 = vmax.f32 %v747, 0.0
      %v765 = vmax.f32 %v750, 0.0
      %v766 = vmax.f32 %v753, 0.0
      %v767 = vmax.f32 %v756, 0.0
      %v768 = vmax.f32 %v759, 0.0
      %v769 = vld [vmem:[%s5] sm:$0xff]
      %v770 = vld [vmem:[%s6] sm:$0x1]
      %v772 = vperm.slane %v770, 0
      %v774 = vsel %vm610, %v312, 0
      %v776 = vsel %vm610, %v313, 0
      %v778 = vsel %vm610, %v314, 0
      %v780 = vsel %vm610, %v315, 0
      %v782 = vsel %vm610, %v316, 0
      %v784 = vsel %vm610, %v317, 0
      %v786 = vsel %vm610, %v318, 0
      %v788 = vsel %vm610, %v319, 0
      %790 = vmatpush.msra.mxu0 0.0
      %791 = vmatpush.msra.mxu0 0.0
      %792 = vmatpush.msra.mxu0 0.0
      %793 = vmatpush.msra.mxu0 0.0
      %794 = vmatpush.msra.mxu0 0.0
      %795 = vmatpush.msra.mxu0 0.0
      %796 = vmatpush.msra.mxu0 0.0
      %797 = vmatpush.msra.mxu0 0.0
      %798 = vmatpush.msra.mxu0 0.0
      %799 = vmatpush.msra.mxu0 0.0
      %800 = vmatpush.msra.mxu0 0.0
      %801 = vmatpush.msra.mxu0 0.0
      %802 = vmatpush.msra.mxu0 0.0
      %803 = vmatpush.msra.mxu0 0.0
      %804 = vmatpush.msra.mxu0 0.0
      %805 = vmatpush.msra.mxu0 %v769
      %806 = vmatmul.f32.gmra.mxu0 %v774
      %v807 = vpop.f32.mrf.mxu0
      %v808 = vadd.f32 %v772, %v807
      %809 = vmatmul.f32.gmra.mxu0 %v776
      %v810 = vpop.f32.mrf.mxu0
      %v811 = vadd.f32 %v772, %v810
      %812 = vmatmul.f32.gmra.mxu0 %v778
      %v813 = vpop.f32.mrf.mxu0
      %v814 = vadd.f32 %v772, %v813
      %815 = vmatmul.f32.gmra.mxu0 %v780
      %v816 = vpop.f32.mrf.mxu0
      %v817 = vadd.f32 %v772, %v816
      %818 = vmatmul.f32.gmra.mxu0 %v782
      %v819 = vpop.f32.mrf.mxu0
      %v820 = vadd.f32 %v772, %v819
      %821 = vmatmul.f32.gmra.mxu0 %v784
      %v822 = vpop.f32.mrf.mxu0
      %v823 = vadd.f32 %v772, %v822
      %824 = vmatmul.f32.gmra.mxu0 %v786
      %v825 = vpop.f32.mrf.mxu0
      %v826 = vadd.f32 %v772, %v825
      %827 = vmatmul.f32.gmra.mxu0 %v788
      %v828 = vpop.f32.mrf.mxu0
      %v829 = vadd.f32 %v772, %v828
      %830 = vdwg.mxu0
      %831 = vst.msk [vmem:[#allocation2] sm:$0xff] %vm610, 0.0
      %vm832 = vcmask 58368
      %833 = vst.msk [vmem:[#allocation2 + $0x8] sm:$0x3] %vm832, 0.0
      %s834 = scalar_lea.vmem [#allocation2], 144
      %835 = vst.msk [vmem:[%s834] sm:$0xff] %vm610, 0.0
      %836 = vst.msk [vmem:[%s834 + $0x8] sm:$0x3] %vm832, 0.0
      %vm837 = vcmask 57344
      %838 = vst.msk [vmem:[#allocation2] sm:$0x1] %vm837, 0.0
      %839 = vst.msk [vmem:[#allocation2 + $0x10] sm:$0x1] %vm837, 0.0
      %840 = vst.msk [vmem:[#allocation2 + $0x20] sm:$0x1] %vm837, 0.0
      %841 = vst.msk [vmem:[#allocation2 + $0x30] sm:$0x1] %vm837, 0.0
      %842 = vst.msk [vmem:[#allocation2 + $0x40] sm:$0x1] %vm837, 0.0
      %843 = vst.msk [vmem:[#allocation2 + $0x50] sm:$0x1] %vm837, 0.0
      %844 = vst.msk [vmem:[#allocation2 + $0x60] sm:$0x1] %vm837, 0.0
      %845 = vst.msk [vmem:[#allocation2 + $0x70] sm:$0x1] %vm837, 0.0
      %846 = vst.msk [vmem:[#allocation2 + $0x80] sm:$0x1] %vm837, 0.0
      %847 = vst.msk [vmem:[#allocation2 + $0x90] sm:$0x1] %vm837, 0.0
      %848 = vst.msk [vmem:[#allocation2 + $0x9] sm:$0x1] %vm837, 0.0
      %849 = vst.msk [vmem:[#allocation2 + $0x19] sm:$0x1] %vm837, 0.0
      %850 = vst.msk [vmem:[#allocation2 + $0x29] sm:$0x1] %vm837, 0.0
      %851 = vst.msk [vmem:[#allocation2 + $0x39] sm:$0x1] %vm837, 0.0
      %852 = vst.msk [vmem:[#allocation2 + $0x49] sm:$0x1] %vm837, 0.0
      %853 = vst.msk [vmem:[#allocation2 + $0x59] sm:$0x1] %vm837, 0.0
      %854 = vst.msk [vmem:[#allocation2 + $0x69] sm:$0x1] %vm837, 0.0
      %855 = vst.msk [vmem:[#allocation2 + $0x79] sm:$0x1] %vm837, 0.0
      %856 = vst.msk [vmem:[#allocation2 + $0x89] sm:$0x1] %vm837, 0.0
      %857 = vst.msk [vmem:[#allocation2 + $0x99] sm:$0x1] %vm837, 0.0
      %s858 = scalar_lea.vmem [#allocation2], 16
      %859 = vst.msk [vmem:[%s858 + $0x1] sm:$0xff] %vm610, %v761
      %860 = vst.msk [vmem:[%s858 + $0x11] sm:$0xff] %vm610, %v762
      %861 = vst.msk [vmem:[%s858 + $0x21] sm:$0xff] %vm610, %v763
      %862 = vst.msk [vmem:[%s858 + $0x31] sm:$0xff] %vm610, %v764
      %863 = vst.msk [vmem:[%s858 + $0x41] sm:$0xff] %vm610, %v765
      %864 = vst.msk [vmem:[%s858 + $0x51] sm:$0xff] %vm610, %v766
      %865 = vst.msk [vmem:[%s858 + $0x61] sm:$0xff] %vm610, %v767
      %866 = vst.msk [vmem:[%s858 + $0x71] sm:$0xff] %vm610, %v768
      %v867 = vld [vmem:[#allocation2] sm:$0xff]
      %v868 = vld [vmem:[#allocation2 + $0x10] sm:$0xff]
      %v869 = vld [vmem:[#allocation2 + $0x20] sm:$0xff]
      %v870 = vld [vmem:[#allocation2 + $0x30] sm:$0xff]
      %v871 = vld [vmem:[#allocation2 + $0x40] sm:$0xff]
      %v872 = vld [vmem:[#allocation2 + $0x50] sm:$0xff]
      %v873 = vld [vmem:[#allocation2 + $0x60] sm:$0xff]
      %v874 = vld [vmem:[#allocation2 + $0x70] sm:$0xff]
      %v875 = vld [vmem:[#allocation2 + $0x1] sm:$0xff]
      %v876 = vld [vmem:[#allocation2 + $0x11] sm:$0xff]
      %v877 = vld [vmem:[#allocation2 + $0x21] sm:$0xff]
      %v878 = vld [vmem:[#allocation2 + $0x31] sm:$0xff]
      %v879 = vld [vmem:[#allocation2 + $0x41] sm:$0xff]
      %v880 = vld [vmem:[#allocation2 + $0x51] sm:$0xff]
      %v881 = vld [vmem:[#allocation2 + $0x61] sm:$0xff]
      %v882 = vld [vmem:[#allocation2 + $0x71] sm:$0xff]
      %v883 = vld [vmem:[#allocation2 + $0x2] sm:$0xff]
      %v884 = vld [vmem:[#allocation2 + $0x12] sm:$0xff]
      %v885 = vld [vmem:[#allocation2 + $0x22] sm:$0xff]
      %v886 = vld [vmem:[#allocation2 + $0x32] sm:$0xff]
      %v887 = vld [vmem:[#allocation2 + $0x42] sm:$0xff]
      %v888 = vld [vmem:[#allocation2 + $0x52] sm:$0xff]
      %v889 = vld [vmem:[#allocation2 + $0x62] sm:$0xff]
      %v890 = vld [vmem:[#allocation2 + $0x72] sm:$0xff]
      %v891 = vld [vmem:[%s858] sm:$0xff]
      %v892 = vld [vmem:[%s858 + $0x10] sm:$0xff]
      %v893 = vld [vmem:[%s858 + $0x20] sm:$0xff]
      %v894 = vld [vmem:[%s858 + $0x30] sm:$0xff]
      %v895 = vld [vmem:[%s858 + $0x40] sm:$0xff]
      %v896 = vld [vmem:[%s858 + $0x50] sm:$0xff]
      %v897 = vld [vmem:[%s858 + $0x60] sm:$0xff]
      %v898 = vld [vmem:[%s858 + $0x70] sm:$0xff]
      %v899 = vld [vmem:[%s858 + $0x1] sm:$0xff]
      %v900 = vld [vmem:[%s858 + $0x11] sm:$0xff]
      %v901 = vld [vmem:[%s858 + $0x21] sm:$0xff]
      %v902 = vld [vmem:[%s858 + $0x31] sm:$0xff]
      %v903 = vld [vmem:[%s858 + $0x41] sm:$0xff]
      %v904 = vld [vmem:[%s858 + $0x51] sm:$0xff]
      %v905 = vld [vmem:[%s858 + $0x61] sm:$0xff]
      %v906 = vld [vmem:[%s858 + $0x71] sm:$0xff]
      %v907 = vld [vmem:[%s858 + $0x2] sm:$0xff]
      %v908 = vld [vmem:[%s858 + $0x12] sm:$0xff]
      %v909 = vld [vmem:[%s858 + $0x22] sm:$0xff]
      %v910 = vld [vmem:[%s858 + $0x32] sm:$0xff]
      %v911 = vld [vmem:[%s858 + $0x42] sm:$0xff]
      %v912 = vld [vmem:[%s858 + $0x52] sm:$0xff]
      %v913 = vld [vmem:[%s858 + $0x62] sm:$0xff]
      %v914 = vld [vmem:[%s858 + $0x72] sm:$0xff]
      %s915 = scalar_lea.vmem [#allocation2], 32
      %v916 = vld [vmem:[%s915] sm:$0xff]
      %v917 = vld [vmem:[%s915 + $0x10] sm:$0xff]
      %v918 = vld [vmem:[%s915 + $0x20] sm:$0xff]
      %v919 = vld [vmem:[%s915 + $0x30] sm:$0xff]
      %v920 = vld [vmem:[%s915 + $0x40] sm:$0xff]
      %v921 = vld [vmem:[%s915 + $0x50] sm:$0xff]
      %v922 = vld [vmem:[%s915 + $0x60] sm:$0xff]
      %v923 = vld [vmem:[%s915 + $0x70] sm:$0xff]
      %v924 = vld [vmem:[%s915 + $0x1] sm:$0xff]
      %v925 = vld [vmem:[%s915 + $0x11] sm:$0xff]
      %v926 = vld [vmem:[%s915 + $0x21] sm:$0xff]
      %v927 = vld [vmem:[%s915 + $0x31] sm:$0xff]
      %v928 = vld [vmem:[%s915 + $0x41] sm:$0xff]
      %v929 = vld [vmem:[%s915 + $0x51] sm:$0xff]
      %v930 = vld [vmem:[%s915 + $0x61] sm:$0xff]
      %v931 = vld [vmem:[%s915 + $0x71] sm:$0xff]
      %v932 = vld [vmem:[%s915 + $0x2] sm:$0xff]
      %v933 = vld [vmem:[%s915 + $0x12] sm:$0xff]
      %v934 = vld [vmem:[%s915 + $0x22] sm:$0xff]
      %v935 = vld [vmem:[%s915 + $0x32] sm:$0xff]
      %v936 = vld [vmem:[%s915 + $0x42] sm:$0xff]
      %v937 = vld [vmem:[%s915 + $0x52] sm:$0xff]
      %v938 = vld [vmem:[%s915 + $0x62] sm:$0xff]
      %v939 = vld [vmem:[%s915 + $0x72] sm:$0xff]
      %948 = vrot.lane.b32.xlu0 %v875, 8
      %v949 = vpop.permute.xlu0 %948
      %950 = vrot.lane.b32.xlu0 %v876, 8
      %v951 = vpop.permute.xlu0 %950
      %952 = vrot.lane.b32.xlu0 %v877, 8
      %v953 = vpop.permute.xlu0 %952
      %954 = vrot.lane.b32.xlu0 %v878, 8
      %v955 = vpop.permute.xlu0 %954
      %956 = vrot.lane.b32.xlu0 %v879, 8
      %v957 = vpop.permute.xlu0 %956
      %958 = vrot.lane.b32.xlu0 %v880, 8
      %v959 = vpop.permute.xlu0 %958
      %960 = vrot.lane.b32.xlu0 %v881, 8
      %v961 = vpop.permute.xlu0 %960
      %962 = vrot.lane.b32.xlu0 %v882, 8
      %v963 = vpop.permute.xlu0 %962
      %980 = vrot.lane.b32.xlu0 %v883, 16
      %v981 = vpop.permute.xlu0 %980
      %982 = vrot.lane.b32.xlu0 %v884, 16
      %v983 = vpop.permute.xlu0 %982
      %984 = vrot.lane.b32.xlu0 %v885, 16
      %v985 = vpop.permute.xlu0 %984
      %986 = vrot.lane.b32.xlu0 %v886, 16
      %v987 = vpop.permute.xlu0 %986
      %988 = vrot.lane.b32.xlu0 %v887, 16
      %v989 = vpop.permute.xlu0 %988
      %990 = vrot.lane.b32.xlu0 %v888, 16
      %v991 = vpop.permute.xlu0 %990
      %992 = vrot.lane.b32.xlu0 %v889, 16
      %v993 = vpop.permute.xlu0 %992
      %994 = vrot.lane.b32.xlu0 %v890, 16
      %v995 = vpop.permute.xlu0 %994
      %1012 = vrot.lane.b32.xlu0 %v891, 24
      %v1013 = vpop.permute.xlu0 %1012
      %1014 = vrot.lane.b32.xlu0 %v892, 24
      %v1015 = vpop.permute.xlu0 %1014
      %1016 = vrot.lane.b32.xlu0 %v893, 24
      %v1017 = vpop.permute.xlu0 %1016
      %1018 = vrot.lane.b32.xlu0 %v894, 24
      %v1019 = vpop.permute.xlu0 %1018
      %1020 = vrot.lane.b32.xlu0 %v895, 24
      %v1021 = vpop.permute.xlu0 %1020
      %1022 = vrot.lane.b32.xlu0 %v896, 24
      %v1023 = vpop.permute.xlu0 %1022
      %1024 = vrot.lane.b32.xlu0 %v897, 24
      %v1025 = vpop.permute.xlu0 %1024
      %1026 = vrot.lane.b32.xlu0 %v898, 24
      %v1027 = vpop.permute.xlu0 %1026
      %1044 = vrot.lane.b32.xlu0 %v899, 32
      %v1045 = vpop.permute.xlu0 %1044
      %1046 = vrot.lane.b32.xlu0 %v900, 32
      %v1047 = vpop.permute.xlu0 %1046
      %1048 = vrot.lane.b32.xlu0 %v901, 32
      %v1049 = vpop.permute.xlu0 %1048
      %1050 = vrot.lane.b32.xlu0 %v902, 32
      %v1051 = vpop.permute.xlu0 %1050
      %1052 = vrot.lane.b32.xlu0 %v903, 32
      %v1053 = vpop.permute.xlu0 %1052
      %1054 = vrot.lane.b32.xlu0 %v904, 32
      %v1055 = vpop.permute.xlu0 %1054
      %1056 = vrot.lane.b32.xlu0 %v905, 32
      %v1057 = vpop.permute.xlu0 %1056
      %1058 = vrot.lane.b32.xlu0 %v906, 32
      %v1059 = vpop.permute.xlu0 %1058
      %1076 = vrot.lane.b32.xlu0 %v907, 40
      %v1077 = vpop.permute.xlu0 %1076
      %1078 = vrot.lane.b32.xlu0 %v908, 40
      %v1079 = vpop.permute.xlu0 %1078
      %1080 = vrot.lane.b32.xlu0 %v909, 40
      %v1081 = vpop.permute.xlu0 %1080
      %1082 = vrot.lane.b32.xlu0 %v910, 40
      %v1083 = vpop.permute.xlu0 %1082
      %1084 = vrot.lane.b32.xlu0 %v911, 40
      %v1085 = vpop.permute.xlu0 %1084
      %1086 = vrot.lane.b32.xlu0 %v912, 40
      %v1087 = vpop.permute.xlu0 %1086
      %1088 = vrot.lane.b32.xlu0 %v913, 40
      %v1089 = vpop.permute.xlu0 %1088
      %1090 = vrot.lane.b32.xlu0 %v914, 40
      %v1091 = vpop.permute.xlu0 %1090
      %1108 = vrot.lane.b32.xlu0 %v916, 48
      %v1109 = vpop.permute.xlu0 %1108
      %1110 = vrot.lane.b32.xlu0 %v917, 48
      %v1111 = vpop.permute.xlu0 %1110
      %1112 = vrot.lane.b32.xlu0 %v918, 48
      %v1113 = vpop.permute.xlu0 %1112
      %1114 = vrot.lane.b32.xlu0 %v919, 48
      %v1115 = vpop.permute.xlu0 %1114
      %1116 = vrot.lane.b32.xlu0 %v920, 48
      %v1117 = vpop.permute.xlu0 %1116
      %1118 = vrot.lane.b32.xlu0 %v921, 48
      %v1119 = vpop.permute.xlu0 %1118
      %1120 = vrot.lane.b32.xlu0 %v922, 48
      %v1121 = vpop.permute.xlu0 %1120
      %1122 = vrot.lane.b32.xlu0 %v923, 48
      %v1123 = vpop.permute.xlu0 %1122
      %1140 = vrot.lane.b32.xlu0 %v924, 56
      %v1141 = vpop.permute.xlu0 %1140
      %1142 = vrot.lane.b32.xlu0 %v925, 56
      %v1143 = vpop.permute.xlu0 %1142
      %1144 = vrot.lane.b32.xlu0 %v926, 56
      %v1145 = vpop.permute.xlu0 %1144
      %1146 = vrot.lane.b32.xlu0 %v927, 56
      %v1147 = vpop.permute.xlu0 %1146
      %1148 = vrot.lane.b32.xlu0 %v928, 56
      %v1149 = vpop.permute.xlu0 %1148
      %1150 = vrot.lane.b32.xlu0 %v929, 56
      %v1151 = vpop.permute.xlu0 %1150
      %1152 = vrot.lane.b32.xlu0 %v930, 56
      %v1153 = vpop.permute.xlu0 %1152
      %1154 = vrot.lane.b32.xlu0 %v931, 56
      %v1155 = vpop.permute.xlu0 %1154
      %1172 = vrot.lane.b32.xlu0 %v932, 64
      %v1173 = vpop.permute.xlu0 %1172
      %1174 = vrot.lane.b32.xlu0 %v933, 64
      %v1175 = vpop.permute.xlu0 %1174
      %1176 = vrot.lane.b32.xlu0 %v934, 64
      %v1177 = vpop.permute.xlu0 %1176
      %1178 = vrot.lane.b32.xlu0 %v935, 64
      %v1179 = vpop.permute.xlu0 %1178
      %1180 = vrot.lane.b32.xlu0 %v936, 64
      %v1181 = vpop.permute.xlu0 %1180
      %1182 = vrot.lane.b32.xlu0 %v937, 64
      %v1183 = vpop.permute.xlu0 %1182
      %1184 = vrot.lane.b32.xlu0 %v938, 64
      %v1185 = vpop.permute.xlu0 %1184
      %1186 = vrot.lane.b32.xlu0 %v939, 64
      %v1187 = vpop.permute.xlu0 %1186
      %v1196 = vsel %vm610, %v867, %v949
      %v1197 = vsel %vm610, %v868, %v951
      %v1198 = vsel %vm610, %v869, %v953
      %v1199 = vsel %vm610, %v870, %v955
      %v1200 = vsel %vm610, %v871, %v957
      %v1201 = vsel %vm610, %v872, %v959
      %v1202 = vsel %vm610, %v873, %v961
      %v1203 = vsel %vm610, %v874, %v963
      %v1204 = vsel %vm619, %v1196, %v981
      %v1205 = vsel %vm619, %v1197, %v983
      %v1206 = vsel %vm619, %v1198, %v985
      %v1207 = vsel %vm619, %v1199, %v987
      %v1208 = vsel %vm619, %v1200, %v989
      %v1209 = vsel %vm619, %v1201, %v991
      %v1210 = vsel %vm619, %v1202, %v993
      %v1211 = vsel %vm619, %v1203, %v995
      %v1212 = vsel %vm628, %v1204, %v1013
      %v1213 = vsel %vm628, %v1205, %v1015
      %v1214 = vsel %vm628, %v1206, %v1017
      %v1215 = vsel %vm628, %v1207, %v1019
      %v1216 = vsel %vm628, %v1208, %v1021
      %v1217 = vsel %vm628, %v1209, %v1023
      %v1218 = vsel %vm628, %v1210, %v1025
      %v1219 = vsel %vm628, %v1211, %v1027
      %v1220 = vsel %vm637, %v1212, %v1045
      %v1221 = vsel %vm637, %v1213, %v1047
      %v1222 = vsel %vm637, %v1214, %v1049
      %v1223 = vsel %vm637, %v1215, %v1051
      %v1224 = vsel %vm637, %v1216, %v1053
      %v1225 = vsel %vm637, %v1217, %v1055
      %v1226 = vsel %vm637, %v1218, %v1057
      %v1227 = vsel %vm637, %v1219, %v1059
      %v1228 = vsel %vm646, %v1220, %v1077
      %v1229 = vsel %vm646, %v1221, %v1079
      %v1230 = vsel %vm646, %v1222, %v1081
      %v1231 = vsel %vm646, %v1223, %v1083
      %v1232 = vsel %vm646, %v1224, %v1085
      %v1233 = vsel %vm646, %v1225, %v1087
      %v1234 = vsel %vm646, %v1226, %v1089
      %v1235 = vsel %vm646, %v1227, %v1091
      %v1236 = vsel %vm655, %v1228, %v1109
      %v1237 = vsel %vm655, %v1229, %v1111
      %v1238 = vsel %vm655, %v1230, %v1113
      %v1239 = vsel %vm655, %v1231, %v1115
      %v1240 = vsel %vm655, %v1232, %v1117
      %v1241 = vsel %vm655, %v1233, %v1119
      %v1242 = vsel %vm655, %v1234, %v1121
      %v1243 = vsel %vm655, %v1235, %v1123
      %v1244 = vsel %vm664, %v1236, %v1141
      %v1245 = vsel %vm664, %v1237, %v1143
      %v1246 = vsel %vm664, %v1238, %v1145
      %v1247 = vsel %vm664, %v1239, %v1147
      %v1248 = vsel %vm664, %v1240, %v1149
      %v1249 = vsel %vm664, %v1241, %v1151
      %v1250 = vsel %vm664, %v1242, %v1153
      %v1251 = vsel %vm664, %v1243, %v1155
      %v1252 = vsel %vm673, %v1244, %v1173
      %v1253 = vsel %vm673, %v1245, %v1175
      %v1254 = vsel %vm673, %v1246, %v1177
      %v1255 = vsel %vm673, %v1247, %v1179
      %v1256 = vsel %vm673, %v1248, %v1181
      %v1257 = vsel %vm673, %v1249, %v1183
      %v1258 = vsel %vm673, %v1250, %v1185
      %v1259 = vsel %vm673, %v1251, %v1187
      %v1260 = vld [vmem:[%s3] sm:$0xff]
      %v1261 = vld [vmem:[%s3 + $0x8] sm:$0xff]
      %v1262 = vld [vmem:[%s3 + $0x10] sm:$0xff]
      %v1263 = vld [vmem:[%s3 + $0x18] sm:$0xff]
      %v1264 = vld [vmem:[%s3 + $0x20] sm:$0xff]
      %v1265 = vld [vmem:[%s3 + $0x28] sm:$0xff]
      %v1266 = vld [vmem:[%s3 + $0x30] sm:$0xff]
      %v1267 = vld [vmem:[%s3 + $0x38] sm:$0xff]
      %v1268 = vld [vmem:[%s3 + $0x40] sm:$0xff]
      %v1270 = vsel %vm695, %v1252, 0
      %v1273 = vsel %vm695, %v1253, 0
      %v1276 = vsel %vm695, %v1254, 0
      %v1279 = vsel %vm695, %v1255, 0
      %v1282 = vsel %vm695, %v1256, 0
      %v1285 = vsel %vm695, %v1257, 0
      %v1288 = vsel %vm695, %v1258, 0
      %v1291 = vsel %vm695, %v1259, 0
      %1293 = vmatpush.msra.mxu0 0.0
      %1294 = vmatpush.msra.mxu0 0.0
      %1295 = vmatpush.msra.mxu0 0.0
      %1296 = vmatpush.msra.mxu0 0.0
      %1297 = vmatpush.msra.mxu0 0.0
      %1298 = vmatpush.msra.mxu0 0.0
      %1299 = vmatpush.msra.mxu0 0.0
      %1300 = vmatpush.msra.mxu0 %v1268
      %1301 = vmatpush.msra.mxu0 %v1267
      %1302 = vmatpush.msra.mxu0 %v1266
      %1303 = vmatpush.msra.mxu0 %v1265
      %1304 = vmatpush.msra.mxu0 %v1264
      %1305 = vmatpush.msra.mxu0 %v1263
      %1306 = vmatpush.msra.mxu0 %v1262
      %1307 = vmatpush.msra.mxu0 %v1261
      %1308 = vmatpush.msra.mxu0 %v1260
      %1309 = vmatmul.f32.gmra.mxu0 %v1270
      %v1310 = vpop.f32.mrf.mxu0
      %v1311 = vadd.f32 0.0, %v1310
      %1312 = vmatmul.f32.gmra.mxu0 %v1273
      %v1313 = vpop.f32.mrf.mxu0
      %v1314 = vadd.f32 0.0, %v1313
      %1315 = vmatmul.f32.gmra.mxu0 %v1276
      %v1316 = vpop.f32.mrf.mxu0
      %v1317 = vadd.f32 0.0, %v1316
      %1318 = vmatmul.f32.gmra.mxu0 %v1279
      %v1319 = vpop.f32.mrf.mxu0
      %v1320 = vadd.f32 0.0, %v1319
      %1321 = vmatmul.f32.gmra.mxu0 %v1282
      %v1322 = vpop.f32.mrf.mxu0
      %v1323 = vadd.f32 0.0, %v1322
      %1324 = vmatmul.f32.gmra.mxu0 %v1285
      %v1325 = vpop.f32.mrf.mxu0
      %v1326 = vadd.f32 0.0, %v1325
      %1327 = vmatmul.f32.gmra.mxu0 %v1288
      %v1328 = vpop.f32.mrf.mxu0
      %v1329 = vadd.f32 0.0, %v1328
      %1330 = vmatmul.f32.gmra.mxu0 %v1291
      %v1331 = vpop.f32.mrf.mxu0
      %v1332 = vadd.f32 0.0, %v1331
      %1333 = vdwg.mxu0
      %v1334 = vadd.f32 %v808, %v1311
      %v1335 = vadd.f32 %v811, %v1314
      %v1336 = vadd.f32 %v814, %v1317
      %v1337 = vadd.f32 %v817, %v1320
      %v1338 = vadd.f32 %v820, %v1323
      %v1339 = vadd.f32 %v823, %v1326
      %v1340 = vadd.f32 %v826, %v1329
      %v1341 = vadd.f32 %v829, %v1332
      %v1342 = vld [vmem:[%s4] sm:$0x1]
      %v1344 = vperm.slane %v1342, 0
      %v1346 = vadd.f32 %v1334, %v1344
      %v1347 = vadd.f32 %v1335, %v1344
      %v1348 = vadd.f32 %v1336, %v1344
      %v1349 = vadd.f32 %v1337, %v1344
      %v1350 = vadd.f32 %v1338, %v1344
      %v1351 = vadd.f32 %v1339, %v1344
      %v1352 = vadd.f32 %v1340, %v1344
      %v1353 = vadd.f32 %v1341, %v1344
      %v1354 = vmax.f32 %v1346, 0.0
      %v1355 = vmax.f32 %v1347, 0.0
      %v1356 = vmax.f32 %v1348, 0.0
      %v1357 = vmax.f32 %v1349, 0.0
      %v1358 = vmax.f32 %v1350, 0.0
      %v1359 = vmax.f32 %v1351, 0.0
      %v1360 = vmax.f32 %v1352, 0.0
      %v1361 = vmax.f32 %v1353, 0.0
      %1362 = vxpose.xlu0.b32.start [1/16] %v1354, 128
      %1363 = vxpose.xlu0.b32.cont [2/16] %v1355, 128
      %1364 = vxpose.xlu0.b32.cont [3/16] %v1356, 128
      %1365 = vxpose.xlu0.b32.cont [4/16] %v1357, 128
      %1366 = vxpose.xlu0.b32.cont [5/16] %v1358, 128
      %1367 = vxpose.xlu0.b32.cont [6/16] %v1359, 128
      %1368 = vxpose.xlu0.b32.cont [7/16] %v1360, 128
      %1369 = vxpose.xlu0.b32.cont [8/16] %v1361, 128
      %1370 = vxpose.xlu0.b32.cont [9/16] 0.0, 128
      %1371 = vxpose.xlu0.b32.cont [10/16] 0.0, 128
      %1372 = vxpose.xlu0.b32.cont [11/16] 0.0, 128
      %1373 = vxpose.xlu0.b32.cont [12/16] 0.0, 128
      %1374 = vxpose.xlu0.b32.cont [13/16] 0.0, 128
      %1375 = vxpose.xlu0.b32.cont [14/16] 0.0, 128
      %1376 = vxpose.xlu0.b32.cont [15/16] 0.0, 128
      %1377 = vxpose.xlu0.b32.end [16/16] 0.0, 128
      %v1378 = vpop.trf.xlu0
      %v1379 = vpop.trf.xlu0
      %v1380 = vpop.trf.xlu0
      %v1381 = vpop.trf.xlu0
      %v1382 = vpop.trf.xlu0
      %v1383 = vpop.trf.xlu0
      %v1384 = vpop.trf.xlu0
      %v1385 = vpop.trf.xlu0
      %v1386 = vpop.trf.xlu0
      %v1387 = vpop.trf.xlu0
      %v1388 = vpop.trf.xlu0
      %v1389 = vpop.trf.xlu0
      %v1390 = vpop.trf.xlu0
      %v1391 = vpop.trf.xlu0
      %v1392 = vpop.trf.xlu0
      %v1393 = vpop.trf.xlu0
      %1394 = vst.msk [vmem:[%s276] sm:$0xff] %vm673, %v1378
      %p1395 = scmp.lt.s32.totalorder %s18, 1
      %s1396 = scalar_select %p1395, %s18, 1
      %s1397 = smul.addr %s1396, 8
      %s1398 = scalar_lea.vmem %s7, %s1397
      // Predicated region
      $region49: #{basic_block_forward.1} parent=47 // pred_check
        %p1399 = pneg %p188
      $region50: #{basic_block_forward.1} parent=47 // pred_check_branch
        %1401 = sbr.rel (%p1399) target = $region52
      $region51: #{basic_block_forward.1} parent=47 // pred_region
        _
      $region52: #{basic_block_forward.1} parent=47 // pred_fallthru
        _
    $region48: #{basic_block_forward.1} parent=5 // pred_fallthru
      _
    %p1402 = scmp.le.s32.totalorder 2, %s13
    // Predicated region
    $region53: #{basic_block_forward.1} parent=5 // pred_check
      %p1403 = pneg %p1402
    $region54: #{basic_block_forward.1} parent=5 // pred_check_branch
      %1405 = sbr.rel (%p1403) target = $region56
    $region55: #{basic_block_forward.1} parent=5 // pred_region
      %s1406 = ssub.s32 %s13, 2
      // Predicated region
      $region57: #{basic_block_forward.1} parent=55 // pred_check
        %p1407 = pneg %p194
      $region58: #{basic_block_forward.1} parent=55 // pred_check_branch
        %1409 = sbr.rel (%p1407) target = $region60
      $region59: #{basic_block_forward.1} parent=55 // pred_region
        %p1410 = scmp.lt.s32.totalorder %s19, 1
        %s1411 = scalar_select %p1410, %s19, 1
        %s1412 = smul.addr %s1411, 8
        %s1413 = scalar_lea.vmem %s7, %s1412
      $region60: #{basic_block_forward.1} parent=55 // pred_fallthru
        _
    $region56: #{basic_block_forward.1} parent=5 // pred_fallthru
      _
  $region6: #{basic_block_forward.1} parent=0 // loop_footer
    %s17 = sadd.s32 1, %s13
  $region7: #{basic_block_forward.1} parent=0 // loop_footer_branch
    %12 = sbr.rel target = $region3
  $region8: #{basic_block_forward.1} parent=0 // loop_exit
    _

</llo_original>
